<compile_context>
chip_gen: v6e
topology: v6e:2x2x1
jax: 0.10.0
libtpu: 0.0.40
codegen_flags: <defaults>
</compile_context>

<pallas_src>
import jax
import jax.numpy as jnp
from jax.experimental import pallas as pl
from jax.experimental.pallas import tpu as pltpu


def _round_up(n, m):
    return ((n + m - 1) // m) * m


# ----------------------------------------------------------------------------
# Kernel: both autoencoders' full 6-layer chains (3 enc + 3 dec each) in one
# unrolled body. All dims are zero-padded / lane-dense (see header).
# ----------------------------------------------------------------------------
def _fused_ae_kernel(xs_ref, xe_ref, ws_ref, we_ref, bs_ref, be_ref,
                     enc_s_ref, dec_s_ref, enc_e_ref, dec_e_ref):
    # xs_ref: (tm, Ps)      xe_ref: (tm, Pe)        padded input rows
    # ws_ref: (6, Ps, Ps)   we_ref: (6, Pe, Pe)     zero-padded (in,out) weights
    # bs_ref: (8, Ps)       be_ref: (8, Pe)         bias rows 0..5, rows 6..7 zero
    # enc_*_ref / dec_*_ref: (tm, P*)               layer-3 / layer-6 activations
    hs = xs_ref[...]
    he = xe_ref[...]
    b_s = bs_ref[...]          # load whole (8, P) bias tile once
    b_e = be_ref[...]
    for layer in range(6):     # unrolled; the two chains are independent and interleave
        zs = jnp.dot(hs, ws_ref[layer],
                     preferred_element_type=jnp.float32) + b_s[layer:layer + 1, :]
        ze = jnp.dot(he, we_ref[layer],
                     preferred_element_type=jnp.float32) + b_e[layer:layer + 1, :]
        # sigmoid(z) = 0.5 * tanh(0.5 z) + 0.5  -> one exact EUP op per layer.
        hs = 0.5 * jnp.tanh(0.5 * zs) + 0.5
        he = 0.5 * jnp.tanh(0.5 * ze) + 0.5
        if layer == 2:
            enc_s_ref[...] = hs
            enc_e_ref[...] = he
    dec_s_ref[...] = hs
    dec_e_ref[...] = he


# ----------------------------------------------------------------------------
# One-time parameter packing (run at init, NOT per forward call).
# ----------------------------------------------------------------------------
def pack_autoencoder_params(params):
    """params: list of 6 (w:(in,out), b:(out,)) -> (w_slab (6,P,P), b_slab (8,P))."""
    p = _round_up(max(max(w.shape) for w, _ in params), 128)
    w_slab = jnp.stack([
        jnp.pad(w.astype(jnp.float32),
                ((0, p - w.shape[0]), (0, p - w.shape[1])))
        for w, _ in params])                                   # (6, P, P)
    rows = [jnp.pad(b.astype(jnp.float32), (0, p - b.shape[0])) for _, b in params]
    rows += [jnp.zeros((p,), jnp.float32)] * (8 - len(rows))
    b_slab = jnp.stack(rows)                                   # (8, P)
    return w_slab, b_slab


# ----------------------------------------------------------------------------
# Forward wrapper (jitted): pads inputs, one pallas_call, slices outputs.
# ----------------------------------------------------------------------------
@jax.jit
def autoencoder_forward(structure_vect, side_effect_vect,
                        structure_packed, side_effect_packed):
    w_s, b_s = structure_packed
    w_e, b_e = side_effect_packed
    batch, f_s = structure_vect.shape
    f_e = side_effect_vect.shape[1]
    p_s = w_s.shape[-1]
    p_e = w_e.shape[-1]
    enc_dim_s = (f_s // 3) // 3
    enc_dim_e = (f_e // 3) // 3

    # Batch tiling: single step at small batch, 256-row tiles at large batch.
    tm = min(_round_up(batch, 8), 256)
    b_pad = _round_up(batch, tm)
    x_s = jnp.pad(structure_vect.astype(jnp.float32),
                  ((0, b_pad - batch), (0, p_s - f_s)))
    x_e = jnp.pad(side_effect_vect.astype(jnp.float32),
                  ((0, b_pad - batch), (0, p_e - f_e)))

    xs_spec = pl.BlockSpec((tm, p_s), lambda i: (i, 0))
    xe_spec = pl.BlockSpec((tm, p_e), lambda i: (i, 0))
    ws_spec = pl.BlockSpec((6, p_s, p_s), lambda i: (0, 0, 0))   # weights resident
    we_spec = pl.BlockSpec((6, p_e, p_e), lambda i: (0, 0, 0))   # across batch tiles
    bs_spec = pl.BlockSpec((8, p_s), lambda i: (0, 0))
    be_spec = pl.BlockSpec((8, p_e), lambda i: (0, 0))

    enc_s, dec_s, enc_e, dec_e = pl.pallas_call(
        _fused_ae_kernel,
        out_shape=(jax.ShapeDtypeStruct((b_pad, p_s), jnp.float32),
                   jax.ShapeDtypeStruct((b_pad, p_s), jnp.float32),
                   jax.ShapeDtypeStruct((b_pad, p_e), jnp.float32),
                   jax.ShapeDtypeStruct((b_pad, p_e), jnp.float32)),
        grid=(b_pad // tm,),
        in_specs=[xs_spec, xe_spec, ws_spec, we_spec, bs_spec, be_spec],
        out_specs=(xs_spec, xs_spec, xe_spec, xe_spec),
        compiler_params=pltpu.CompilerParams(
            dimension_semantics=("parallel",)),
    )(x_s, x_e, w_s, w_e, b_s, b_e)

    # Slice back to true (unpadded) shapes.
    return (enc_s[:batch, :enc_dim_s],
            dec_s[:batch, :f_s],
            enc_e[:batch, :enc_dim_e],
            dec_e[:batch, :f_e])


# ----------------------------------------------------------------------------
# Parameter construction (matches nn.Linear init; W kept as (in, out))
# ----------------------------------------------------------------------------
def _init_linear(key, in_features, out_features):
    kw, kb = jax.random.split(key)
    bound = 1.0 / jnp.sqrt(jnp.float32(in_features))
    w = jax.random.uniform(kw, (in_features, out_features), jnp.float32,
                           minval=-bound, maxval=bound)
    b = jax.random.uniform(kb, (out_features,), jnp.float32,
                           minval=-bound, maxval=bound)
    return w, b


def make_autoencoder_params(key, num_features):
    """6 Linear layers: enc (F->F, F->h1, h1->h2), dec (h2->h1, h1->F, F->F)."""
    h1 = num_features // 3
    h2 = h1 // 3
    dims = [(num_features, num_features),
            (num_features, h1),
            (h1, h2),
            (h2, h1),
            (h1, num_features),
            (num_features, num_features)]
    keys = jax.random.split(key, len(dims))
    return [_init_linear(k, i, o) for k, (i, o) in zip(keys, dims)]


# ----------------------------------------------------------------------------
# Pure-JAX reference of the same math (for the self-check)
# ----------------------------------------------------------------------------
def _reference_forward(x, params):
    h = x
    enc = None
    for i, (w, b) in enumerate(params):
        h = jax.nn.sigmoid(h @ w + b)
        if i == 2:
            enc = h
    return enc, h


if __name__ == "__main__":
    key = jax.random.PRNGKey(0)
    k_xs, k_xse, k_ps, k_pse = jax.random.split(key, 4)

    NUM_STRUCTURE = 126     # -> hidden1=42, hidden2=14
    NUM_SIDEEFFECT = 90     # -> hidden1=30, hidden2=10
    BATCH = 4

    structure_vect = jax.random.uniform(k_xs, (BATCH, NUM_STRUCTURE), jnp.float32)
    side_effect_vect = jax.random.uniform(k_xse, (BATCH, NUM_SIDEEFFECT), jnp.float32)

    structure_params = make_autoencoder_params(k_ps, NUM_STRUCTURE)
    side_effect_params = make_autoencoder_params(k_pse, NUM_SIDEEFFECT)

    # One-time packing of padded weight/bias slabs (kept across forward calls).
    structure_packed = pack_autoencoder_params(structure_params)
    side_effect_packed = pack_autoencoder_params(side_effect_params)

    enc_s, dec_s, enc_se, dec_se = autoencoder_forward(
        structure_vect, side_effect_vect, structure_packed, side_effect_packed)
    jax.block_until_ready((enc_s, dec_s, enc_se, dec_se))

    # Sanity check against a pure-JAX reference of the same math.
    ref_enc_s, ref_dec_s = _reference_forward(structure_vect, structure_params)
    ref_enc_se, ref_dec_se = _reference_forward(side_effect_vect, side_effect_params)
    assert enc_s.shape == (BATCH, NUM_STRUCTURE // 3 // 3)
    assert dec_s.shape == (BATCH, NUM_STRUCTURE)
    assert enc_se.shape == (BATCH, NUM_SIDEEFFECT // 3 // 3)
    assert dec_se.shape == (BATCH, NUM_SIDEEFFECT)
    assert jnp.allclose(enc_s, ref_enc_s, atol=2e-3)
    assert jnp.allclose(dec_s, ref_dec_s, atol=2e-3)
    assert jnp.allclose(enc_se, ref_enc_se, atol=2e-3)
    assert jnp.allclose(dec_se, ref_dec_se, atol=2e-3)

    print("KERNEL_OK")
</pallas_src>

<mosaic_0001>
module attributes {stable_mosaic.version = 11 : i64} {
  func.func @_fused_ae_kernel(%arg0: i32, %arg1: memref<8x128xf32, #tpu.memory_space<vmem>>, %arg2: memref<8x128xf32, #tpu.memory_space<vmem>>, %arg3: memref<6x128x128xf32, #tpu.memory_space<vmem>>, %arg4: memref<6x128x128xf32, #tpu.memory_space<vmem>>, %arg5: memref<8x128xf32, #tpu.memory_space<vmem>>, %arg6: memref<8x128xf32, #tpu.memory_space<vmem>>, %arg7: memref<8x128xf32, #tpu.memory_space<vmem>>, %arg8: memref<8x128xf32, #tpu.memory_space<vmem>>, %arg9: memref<8x128xf32, #tpu.memory_space<vmem>>, %arg10: memref<8x128xf32, #tpu.memory_space<vmem>>) attributes {dimension_semantics = [#tpu.dimension_semantics<parallel>], iteration_bounds = array<i64: 1>, scalar_prefetch = 0 : i64, scratch_operands = 0 : i64, tpu.core_type = #tpu.core_type<tc>, window_params = [{transform_indices = @transform_0, window_bounds = array<i64: 8, 128>}, {transform_indices = @transform_1, window_bounds = array<i64: 8, 128>}, {pipeline_mode = #tpu.pipeline_mode<synchronous>, transform_indices = @transform_2, window_bounds = array<i64: 6, 128, 128>}, {pipeline_mode = #tpu.pipeline_mode<synchronous>, transform_indices = @transform_3, window_bounds = array<i64: 6, 128, 128>}, {pipeline_mode = #tpu.pipeline_mode<synchronous>, transform_indices = @transform_4, window_bounds = array<i64: 8, 128>}, {pipeline_mode = #tpu.pipeline_mode<synchronous>, transform_indices = @transform_5, window_bounds = array<i64: 8, 128>}, {transform_indices = @transform_6, window_bounds = array<i64: 8, 128>}, {transform_indices = @transform_7, window_bounds = array<i64: 8, 128>}, {transform_indices = @transform_8, window_bounds = array<i64: 8, 128>}, {transform_indices = @transform_9, window_bounds = array<i64: 8, 128>}]} {
    %c0 = arith.constant 0 : index
    %c0_0 = arith.constant 0 : index
    %0 = vector.load %arg1[%c0, %c0_0] : memref<8x128xf32, #tpu.memory_space<vmem>>, vector<8x128xf32>
    %c0_1 = arith.constant 0 : index
    %c0_2 = arith.constant 0 : index
    %1 = vector.load %arg2[%c0_1, %c0_2] : memref<8x128xf32, #tpu.memory_space<vmem>>, vector<8x128xf32>
    %c0_3 = arith.constant 0 : index
    %c0_4 = arith.constant 0 : index
    %2 = vector.load %arg5[%c0_3, %c0_4] : memref<8x128xf32, #tpu.memory_space<vmem>>, vector<8x128xf32>
    %c0_5 = arith.constant 0 : index
    %c0_6 = arith.constant 0 : index
    %3 = vector.load %arg6[%c0_5, %c0_6] : memref<8x128xf32, #tpu.memory_space<vmem>>, vector<8x128xf32>
    %c0_7 = arith.constant 0 : index
    %c0_8 = arith.constant 0 : index
    %c0_9 = arith.constant 0 : index
    %4 = vector.load %arg3[%c0_7, %c0_8, %c0_9] : memref<6x128x128xf32, #tpu.memory_space<vmem>>, vector<1x128x128xf32>
    %5 = vector.shape_cast %4 : vector<1x128x128xf32> to vector<128x128xf32>
    %cst = arith.constant dense<0.000000e+00> : vector<8x128xf32>
    %6 = tpu.matmul %0, %5, %cst {dimension_numbers = #tpu.dot_dimension_numbers<[1], [0], [0], [1], [0, 0, 1, 1], [], []>} : vector<8x128xf32>, vector<128x128xf32>, vector<8x128xf32> -> vector<8x128xf32>
    %7 = vector.extract_strided_slice %2 {offsets = [0, 0], sizes = [1, 128], strides = [1, 1]} : vector<8x128xf32> to vector<1x128xf32>
    %8 = vector.broadcast %7 : vector<1x128xf32> to vector<8x128xf32>
    %9 = arith.addf %6, %8 : vector<8x128xf32>
    %c0_10 = arith.constant 0 : index
    %c0_11 = arith.constant 0 : index
    %c0_12 = arith.constant 0 : index
    %10 = vector.load %arg4[%c0_10, %c0_11, %c0_12] : memref<6x128x128xf32, #tpu.memory_space<vmem>>, vector<1x128x128xf32>
    %11 = vector.shape_cast %10 : vector<1x128x128xf32> to vector<128x128xf32>
    %cst_13 = arith.constant dense<0.000000e+00> : vector<8x128xf32>
    %12 = tpu.matmul %1, %11, %cst_13 {dimension_numbers = #tpu.dot_dimension_numbers<[1], [0], [0], [1], [0, 0, 1, 1], [], []>} : vector<8x128xf32>, vector<128x128xf32>, vector<8x128xf32> -> vector<8x128xf32>
    %13 = vector.extract_strided_slice %3 {offsets = [0, 0], sizes = [1, 128], strides = [1, 1]} : vector<8x128xf32> to vector<1x128xf32>
    %14 = vector.broadcast %13 : vector<1x128xf32> to vector<8x128xf32>
    %15 = arith.addf %12, %14 : vector<8x128xf32>
    %cst_14 = arith.constant 5.000000e-01 : f32
    %16 = vector.broadcast %cst_14 : f32 to vector<8x128xf32>
    %17 = arith.mulf %16, %9 : vector<8x128xf32>
    %18 = math.tanh %17 : vector<8x128xf32>
    %cst_15 = arith.constant 5.000000e-01 : f32
    %19 = vector.broadcast %cst_15 : f32 to vector<8x128xf32>
    %20 = arith.mulf %19, %18 : vector<8x128xf32>
    %cst_16 = arith.constant 5.000000e-01 : f32
    %21 = vector.broadcast %cst_16 : f32 to vector<8x128xf32>
    %22 = arith.addf %20, %21 : vector<8x128xf32>
    %cst_17 = arith.constant 5.000000e-01 : f32
    %23 = vector.broadcast %cst_17 : f32 to vector<8x128xf32>
    %24 = arith.mulf %23, %15 : vector<8x128xf32>
    %25 = math.tanh %24 : vector<8x128xf32>
    %cst_18 = arith.constant 5.000000e-01 : f32
    %26 = vector.broadcast %cst_18 : f32 to vector<8x128xf32>
    %27 = arith.mulf %26, %25 : vector<8x128xf32>
    %cst_19 = arith.constant 5.000000e-01 : f32
    %28 = vector.broadcast %cst_19 : f32 to vector<8x128xf32>
    %29 = arith.addf %27, %28 : vector<8x128xf32>
    %c1 = arith.constant 1 : index
    %c0_20 = arith.constant 0 : index
    %c0_21 = arith.constant 0 : index
    %30 = vector.load %arg3[%c1, %c0_20, %c0_21] : memref<6x128x128xf32, #tpu.memory_space<vmem>>, vector<1x128x128xf32>
    %31 = vector.shape_cast %30 : vector<1x128x128xf32> to vector<128x128xf32>
    %cst_22 = arith.constant dense<0.000000e+00> : vector<8x128xf32>
    %32 = tpu.matmul %22, %31, %cst_22 {dimension_numbers = #tpu.dot_dimension_numbers<[1], [0], [0], [1], [0, 0, 1, 1], [], []>} : vector<8x128xf32>, vector<128x128xf32>, vector<8x128xf32> -> vector<8x128xf32>
    %33 = vector.extract_strided_slice %2 {offsets = [1, 0], sizes = [1, 128], strides = [1, 1]} : vector<8x128xf32> to vector<1x128xf32>
    %34 = vector.broadcast %33 : vector<1x128xf32> to vector<8x128xf32>
    %35 = arith.addf %32, %34 : vector<8x128xf32>
    %c1_23 = arith.constant 1 : index
    %c0_24 = arith.constant 0 : index
    %c0_25 = arith.constant 0 : index
    %36 = vector.load %arg4[%c1_23, %c0_24, %c0_25] : memref<6x128x128xf32, #tpu.memory_space<vmem>>, vector<1x128x128xf32>
    %37 = vector.shape_cast %36 : vector<1x128x128xf32> to vector<128x128xf32>
    %cst_26 = arith.constant dense<0.000000e+00> : vector<8x128xf32>
    %38 = tpu.matmul %29, %37, %cst_26 {dimension_numbers = #tpu.dot_dimension_numbers<[1], [0], [0], [1], [0, 0, 1, 1], [], []>} : vector<8x128xf32>, vector<128x128xf32>, vector<8x128xf32> -> vector<8x128xf32>
    %39 = vector.extract_strided_slice %3 {offsets = [1, 0], sizes = [1, 128], strides = [1, 1]} : vector<8x128xf32> to vector<1x128xf32>
    %40 = vector.broadcast %39 : vector<1x128xf32> to vector<8x128xf32>
    %41 = arith.addf %38, %40 : vector<8x128xf32>
    %cst_27 = arith.constant 5.000000e-01 : f32
    %42 = vector.broadcast %cst_27 : f32 to vector<8x128xf32>
    %43 = arith.mulf %42, %35 : vector<8x128xf32>
    %44 = math.tanh %43 : vector<8x128xf32>
    %cst_28 = arith.constant 5.000000e-01 : f32
    %45 = vector.broadcast %cst_28 : f32 to vector<8x128xf32>
    %46 = arith.mulf %45, %44 : vector<8x128xf32>
    %cst_29 = arith.constant 5.000000e-01 : f32
    %47 = vector.broadcast %cst_29 : f32 to vector<8x128xf32>
    %48 = arith.addf %46, %47 : vector<8x128xf32>
    %cst_30 = arith.constant 5.000000e-01 : f32
    %49 = vector.broadcast %cst_30 : f32 to vector<8x128xf32>
    %50 = arith.mulf %49, %41 : vector<8x128xf32>
    %51 = math.tanh %50 : vector<8x128xf32>
    %cst_31 = arith.constant 5.000000e-01 : f32
    %52 = vector.broadcast %cst_31 : f32 to vector<8x128xf32>
    %53 = arith.mulf %52, %51 : vector<8x128xf32>
    %cst_32 = arith.constant 5.000000e-01 : f32
    %54 = vector.broadcast %cst_32 : f32 to vector<8x128xf32>
    %55 = arith.addf %53, %54 : vector<8x128xf32>
    %c2 = arith.constant 2 : index
    %c0_33 = arith.constant 0 : index
    %c0_34 = arith.constant 0 : index
    %56 = vector.load %arg3[%c2, %c0_33, %c0_34] : memref<6x128x128xf32, #tpu.memory_space<vmem>>, vector<1x128x128xf32>
    %57 = vector.shape_cast %56 : vector<1x128x128xf32> to vector<128x128xf32>
    %cst_35 = arith.constant dense<0.000000e+00> : vector<8x128xf32>
    %58 = tpu.matmul %48, %57, %cst_35 {dimension_numbers = #tpu.dot_dimension_numbers<[1], [0], [0], [1], [0, 0, 1, 1], [], []>} : vector<8x128xf32>, vector<128x128xf32>, vector<8x128xf32> -> vector<8x128xf32>
    %59 = vector.extract_strided_slice %2 {offsets = [2, 0], sizes = [1, 128], strides = [1, 1]} : vector<8x128xf32> to vector<1x128xf32>
    %60 = vector.broadcast %59 : vector<1x128xf32> to vector<8x128xf32>
    %61 = arith.addf %58, %60 : vector<8x128xf32>
    %c2_36 = arith.constant 2 : index
    %c0_37 = arith.constant 0 : index
    %c0_38 = arith.constant 0 : index
    %62 = vector.load %arg4[%c2_36, %c0_37, %c0_38] : memref<6x128x128xf32, #tpu.memory_space<vmem>>, vector<1x128x128xf32>
    %63 = vector.shape_cast %62 : vector<1x128x128xf32> to vector<128x128xf32>
    %cst_39 = arith.constant dense<0.000000e+00> : vector<8x128xf32>
    %64 = tpu.matmul %55, %63, %cst_39 {dimension_numbers = #tpu.dot_dimension_numbers<[1], [0], [0], [1], [0, 0, 1, 1], [], []>} : vector<8x128xf32>, vector<128x128xf32>, vector<8x128xf32> -> vector<8x128xf32>
    %65 = vector.extract_strided_slice %3 {offsets = [2, 0], sizes = [1, 128], strides = [1, 1]} : vector<8x128xf32> to vector<1x128xf32>
    %66 = vector.broadcast %65 : vector<1x128xf32> to vector<8x128xf32>
    %67 = arith.addf %64, %66 : vector<8x128xf32>
    %cst_40 = arith.constant 5.000000e-01 : f32
    %68 = vector.broadcast %cst_40 : f32 to vector<8x128xf32>
    %69 = arith.mulf %68, %61 : vector<8x128xf32>
    %70 = math.tanh %69 : vector<8x128xf32>
    %cst_41 = arith.constant 5.000000e-01 : f32
    %71 = vector.broadcast %cst_41 : f32 to vector<8x128xf32>
    %72 = arith.mulf %71, %70 : vector<8x128xf32>
    %cst_42 = arith.constant 5.000000e-01 : f32
    %73 = vector.broadcast %cst_42 : f32 to vector<8x128xf32>
    %74 = arith.addf %72, %73 : vector<8x128xf32>
    %cst_43 = arith.constant 5.000000e-01 : f32
    %75 = vector.broadcast %cst_43 : f32 to vector<8x128xf32>
    %76 = arith.mulf %75, %67 : vector<8x128xf32>
    %77 = math.tanh %76 : vector<8x128xf32>
    %cst_44 = arith.constant 5.000000e-01 : f32
    %78 = vector.broadcast %cst_44 : f32 to vector<8x128xf32>
    %79 = arith.mulf %78, %77 : vector<8x128xf32>
    %cst_45 = arith.constant 5.000000e-01 : f32
    %80 = vector.broadcast %cst_45 : f32 to vector<8x128xf32>
    %81 = arith.addf %79, %80 : vector<8x128xf32>
    %c0_46 = arith.constant 0 : index
    %c0_47 = arith.constant 0 : index
    %82 = vector.load %arg7[%c0_46, %c0_47] : memref<8x128xf32, #tpu.memory_space<vmem>>, vector<8x128xf32>
    tpu.vector_store %arg7[%c0_46, %c0_47], %74 {strides = array<i32>} : memref<8x128xf32, #tpu.memory_space<vmem>>, vector<8x128xf32>,
    %c0_48 = arith.constant 0 : index
    %c0_49 = arith.constant 0 : index
    %83 = vector.load %arg9[%c0_48, %c0_49] : memref<8x128xf32, #tpu.memory_space<vmem>>, vector<8x128xf32>
    tpu.vector_store %arg9[%c0_48, %c0_49], %81 {strides = array<i32>} : memref<8x128xf32, #tpu.memory_space<vmem>>, vector<8x128xf32>,
    %c3 = arith.constant 3 : index
    %c0_50 = arith.constant 0 : index
    %c0_51 = arith.constant 0 : index
    %84 = vector.load %arg3[%c3, %c0_50, %c0_51] : memref<6x128x128xf32, #tpu.memory_space<vmem>>, vector<1x128x128xf32>
    %85 = vector.shape_cast %84 : vector<1x128x128xf32> to vector<128x128xf32>
    %cst_52 = arith.constant dense<0.000000e+00> : vector<8x128xf32>
    %86 = tpu.matmul %74, %85, %cst_52 {dimension_numbers = #tpu.dot_dimension_numbers<[1], [0], [0], [1], [0, 0, 1, 1], [], []>} : vector<8x128xf32>, vector<128x128xf32>, vector<8x128xf32> -> vector<8x128xf32>
    %87 = vector.extract_strided_slice %2 {offsets = [3, 0], sizes = [1, 128], strides = [1, 1]} : vector<8x128xf32> to vector<1x128xf32>
    %88 = vector.broadcast %87 : vector<1x128xf32> to vector<8x128xf32>
    %89 = arith.addf %86, %88 : vector<8x128xf32>
    %c3_53 = arith.constant 3 : index
    %c0_54 = arith.constant 0 : index
    %c0_55 = arith.constant 0 : index
    %90 = vector.load %arg4[%c3_53, %c0_54, %c0_55] : memref<6x128x128xf32, #tpu.memory_space<vmem>>, vector<1x128x128xf32>
    %91 = vector.shape_cast %90 : vector<1x128x128xf32> to vector<128x128xf32>
    %cst_56 = arith.constant dense<0.000000e+00> : vector<8x128xf32>
    %92 = tpu.matmul %81, %91, %cst_56 {dimension_numbers = #tpu.dot_dimension_numbers<[1], [0], [0], [1], [0, 0, 1, 1], [], []>} : vector<8x128xf32>, vector<128x128xf32>, vector<8x128xf32> -> vector<8x128xf32>
    %93 = vector.extract_strided_slice %3 {offsets = [3, 0], sizes = [1, 128], strides = [1, 1]} : vector<8x128xf32> to vector<1x128xf32>
    %94 = vector.broadcast %93 : vector<1x128xf32> to vector<8x128xf32>
    %95 = arith.addf %92, %94 : vector<8x128xf32>
    %cst_57 = arith.constant 5.000000e-01 : f32
    %96 = vector.broadcast %cst_57 : f32 to vector<8x128xf32>
    %97 = arith.mulf %96, %89 : vector<8x128xf32>
    %98 = math.tanh %97 : vector<8x128xf32>
    %cst_58 = arith.constant 5.000000e-01 : f32
    %99 = vector.broadcast %cst_58 : f32 to vector<8x128xf32>
    %100 = arith.mulf %99, %98 : vector<8x128xf32>
    %cst_59 = arith.constant 5.000000e-01 : f32
    %101 = vector.broadcast %cst_59 : f32 to vector<8x128xf32>
    %102 = arith.addf %100, %101 : vector<8x128xf32>
    %cst_60 = arith.constant 5.000000e-01 : f32
    %103 = vector.broadcast %cst_60 : f32 to vector<8x128xf32>
    %104 = arith.mulf %103, %95 : vector<8x128xf32>
    %105 = math.tanh %104 : vector<8x128xf32>
    %cst_61 = arith.constant 5.000000e-01 : f32
    %106 = vector.broadcast %cst_61 : f32 to vector<8x128xf32>
    %107 = arith.mulf %106, %105 : vector<8x128xf32>
    %cst_62 = arith.constant 5.000000e-01 : f32
    %108 = vector.broadcast %cst_62 : f32 to vector<8x128xf32>
    %109 = arith.addf %107, %108 : vector<8x128xf32>
    %c4 = arith.constant 4 : index
    %c0_63 = arith.constant 0 : index
    %c0_64 = arith.constant 0 : index
    %110 = vector.load %arg3[%c4, %c0_63, %c0_64] : memref<6x128x128xf32, #tpu.memory_space<vmem>>, vector<1x128x128xf32>
    %111 = vector.shape_cast %110 : vector<1x128x128xf32> to vector<128x128xf32>
    %cst_65 = arith.constant dense<0.000000e+00> : vector<8x128xf32>
    %112 = tpu.matmul %102, %111, %cst_65 {dimension_numbers = #tpu.dot_dimension_numbers<[1], [0], [0], [1], [0, 0, 1, 1], [], []>} : vector<8x128xf32>, vector<128x128xf32>, vector<8x128xf32> -> vector<8x128xf32>
    %113 = vector.extract_strided_slice %2 {offsets = [4, 0], sizes = [1, 128], strides = [1, 1]} : vector<8x128xf32> to vector<1x128xf32>
    %114 = vector.broadcast %113 : vector<1x128xf32> to vector<8x128xf32>
    %115 = arith.addf %112, %114 : vector<8x128xf32>
    %c4_66 = arith.constant 4 : index
    %c0_67 = arith.constant 0 : index
    %c0_68 = arith.constant 0 : index
    %116 = vector.load %arg4[%c4_66, %c0_67, %c0_68] : memref<6x128x128xf32, #tpu.memory_space<vmem>>, vector<1x128x128xf32>
    %117 = vector.shape_cast %116 : vector<1x128x128xf32> to vector<128x128xf32>
    %cst_69 = arith.constant dense<0.000000e+00> : vector<8x128xf32>
    %118 = tpu.matmul %109, %117, %cst_69 {dimension_numbers = #tpu.dot_dimension_numbers<[1], [0], [0], [1], [0, 0, 1, 1], [], []>} : vector<8x128xf32>, vector<128x128xf32>, vector<8x128xf32> -> vector<8x128xf32>
    %119 = vector.extract_strided_slice %3 {offsets = [4, 0], sizes = [1, 128], strides = [1, 1]} : vector<8x128xf32> to vector<1x128xf32>
    %120 = vector.broadcast %119 : vector<1x128xf32> to vector<8x128xf32>
    %121 = arith.addf %118, %120 : vector<8x128xf32>
    %cst_70 = arith.constant 5.000000e-01 : f32
    %122 = vector.broadcast %cst_70 : f32 to vector<8x128xf32>
    %123 = arith.mulf %122, %115 : vector<8x128xf32>
    %124 = math.tanh %123 : vector<8x128xf32>
    %cst_71 = arith.constant 5.000000e-01 : f32
    %125 = vector.broadcast %cst_71 : f32 to vector<8x128xf32>
    %126 = arith.mulf %125, %124 : vector<8x128xf32>
    %cst_72 = arith.constant 5.000000e-01 : f32
    %127 = vector.broadcast %cst_72 : f32 to vector<8x128xf32>
    %128 = arith.addf %126, %127 : vector<8x128xf32>
    %cst_73 = arith.constant 5.000000e-01 : f32
    %129 = vector.broadcast %cst_73 : f32 to vector<8x128xf32>
    %130 = arith.mulf %129, %121 : vector<8x128xf32>
    %131 = math.tanh %130 : vector<8x128xf32>
    %cst_74 = arith.constant 5.000000e-01 : f32
    %132 = vector.broadcast %cst_74 : f32 to vector<8x128xf32>
    %133 = arith.mulf %132, %131 : vector<8x128xf32>
    %cst_75 = arith.constant 5.000000e-01 : f32
    %134 = vector.broadcast %cst_75 : f32 to vector<8x128xf32>
    %135 = arith.addf %133, %134 : vector<8x128xf32>
    %c5 = arith.constant 5 : index
    %c0_76 = arith.constant 0 : index
    %c0_77 = arith.constant 0 : index
    %136 = vector.load %arg3[%c5, %c0_76, %c0_77] : memref<6x128x128xf32, #tpu.memory_space<vmem>>, vector<1x128x128xf32>
    %137 = vector.shape_cast %136 : vector<1x128x128xf32> to vector<128x128xf32>
    %cst_78 = arith.constant dense<0.000000e+00> : vector<8x128xf32>
    %138 = tpu.matmul %128, %137, %cst_78 {dimension_numbers = #tpu.dot_dimension_numbers<[1], [0], [0], [1], [0, 0, 1, 1], [], []>} : vector<8x128xf32>, vector<128x128xf32>, vector<8x128xf32> -> vector<8x128xf32>
    %139 = vector.extract_strided_slice %2 {offsets = [5, 0], sizes = [1, 128], strides = [1, 1]} : vector<8x128xf32> to vector<1x128xf32>
    %140 = vector.broadcast %139 : vector<1x128xf32> to vector<8x128xf32>
    %141 = arith.addf %138, %140 : vector<8x128xf32>
    %c5_79 = arith.constant 5 : index
    %c0_80 = arith.constant 0 : index
    %c0_81 = arith.constant 0 : index
    %142 = vector.load %arg4[%c5_79, %c0_80, %c0_81] : memref<6x128x128xf32, #tpu.memory_space<vmem>>, vector<1x128x128xf32>
    %143 = vector.shape_cast %142 : vector<1x128x128xf32> to vector<128x128xf32>
    %cst_82 = arith.constant dense<0.000000e+00> : vector<8x128xf32>
    %144 = tpu.matmul %135, %143, %cst_82 {dimension_numbers = #tpu.dot_dimension_numbers<[1], [0], [0], [1], [0, 0, 1, 1], [], []>} : vector<8x128xf32>, vector<128x128xf32>, vector<8x128xf32> -> vector<8x128xf32>
    %145 = vector.extract_strided_slice %3 {offsets = [5, 0], sizes = [1, 128], strides = [1, 1]} : vector<8x128xf32> to vector<1x128xf32>
    %146 = vector.broadcast %145 : vector<1x128xf32> to vector<8x128xf32>
    %147 = arith.addf %144, %146 : vector<8x128xf32>
    %cst_83 = arith.constant 5.000000e-01 : f32
    %148 = vector.broadcast %cst_83 : f32 to vector<8x128xf32>
    %149 = arith.mulf %148, %141 : vector<8x128xf32>
    %150 = math.tanh %149 : vector<8x128xf32>
    %cst_84 = arith.constant 5.000000e-01 : f32
    %151 = vector.broadcast %cst_84 : f32 to vector<8x128xf32>
    %152 = arith.mulf %151, %150 : vector<8x128xf32>
    %cst_85 = arith.constant 5.000000e-01 : f32
    %153 = vector.broadcast %cst_85 : f32 to vector<8x128xf32>
    %154 = arith.addf %152, %153 : vector<8x128xf32>
    %cst_86 = arith.constant 5.000000e-01 : f32
    %155 = vector.broadcast %cst_86 : f32 to vector<8x128xf32>
    %156 = arith.mulf %155, %147 : vector<8x128xf32>
    %157 = math.tanh %156 : vector<8x128xf32>
    %cst_87 = arith.constant 5.000000e-01 : f32
    %158 = vector.broadcast %cst_87 : f32 to vector<8x128xf32>
    %159 = arith.mulf %158, %157 : vector<8x128xf32>
    %cst_88 = arith.constant 5.000000e-01 : f32
    %160 = vector.broadcast %cst_88 : f32 to vector<8x128xf32>
    %161 = arith.addf %159, %160 : vector<8x128xf32>
    %c0_89 = arith.constant 0 : index
    %c0_90 = arith.constant 0 : index
    %162 = vector.load %arg8[%c0_89, %c0_90] : memref<8x128xf32, #tpu.memory_space<vmem>>, vector<8x128xf32>
    tpu.vector_store %arg8[%c0_89, %c0_90], %154 {strides = array<i32>} : memref<8x128xf32, #tpu.memory_space<vmem>>, vector<8x128xf32>,
    %c0_91 = arith.constant 0 : index
    %c0_92 = arith.constant 0 : index
    %163 = vector.load %arg10[%c0_91, %c0_92] : memref<8x128xf32, #tpu.memory_space<vmem>>, vector<8x128xf32>
    tpu.vector_store %arg10[%c0_91, %c0_92], %161 {strides = array<i32>} : memref<8x128xf32, #tpu.memory_space<vmem>>, vector<8x128xf32>,
    return
  }
  func.func @transform_0(%arg0: i32) -> (i32, i32) {
    %c0_i32 = arith.constant 0 : i32
    %c0_i32_0 = arith.constant 0 : i32
    return %arg0, %c0_i32 : i32, i32
  }
  func.func @transform_1(%arg0: i32) -> (i32, i32) {
    %c0_i32 = arith.constant 0 : i32
    %c0_i32_0 = arith.constant 0 : i32
    return %arg0, %c0_i32 : i32, i32
  }
  func.func @transform_2(%arg0: i32) -> (i32, i32, i32) {
    %c0_i32 = arith.constant 0 : i32
    %c0_i32_0 = arith.constant 0 : i32
    %c0_i32_1 = arith.constant 0 : i32
    %c0_i32_2 = arith.constant 0 : i32
    return %c0_i32, %c0_i32_0, %c0_i32_1 : i32, i32, i32
  }
  func.func @transform_3(%arg0: i32) -> (i32, i32, i32) {
    %c0_i32 = arith.constant 0 : i32
    %c0_i32_0 = arith.constant 0 : i32
    %c0_i32_1 = arith.constant 0 : i32
    %c0_i32_2 = arith.constant 0 : i32
    return %c0_i32, %c0_i32_0, %c0_i32_1 : i32, i32, i32
  }
  func.func @transform_4(%arg0: i32) -> (i32, i32) {
    %c0_i32 = arith.constant 0 : i32
    %c0_i32_0 = arith.constant 0 : i32
    %c0_i32_1 = arith.constant 0 : i32
    return %c0_i32, %c0_i32_0 : i32, i32
  }
  func.func @transform_5(%arg0: i32) -> (i32, i32) {
    %c0_i32 = arith.constant 0 : i32
    %c0_i32_0 = arith.constant 0 : i32
    %c0_i32_1 = arith.constant 0 : i32
    return %c0_i32, %c0_i32_0 : i32, i32
  }
  func.func @transform_6(%arg0: i32) -> (i32, i32) {
    %c0_i32 = arith.constant 0 : i32
    %c0_i32_0 = arith.constant 0 : i32
    return %arg0, %c0_i32 : i32, i32
  }
  func.func @transform_7(%arg0: i32) -> (i32, i32) {
    %c0_i32 = arith.constant 0 : i32
    %c0_i32_0 = arith.constant 0 : i32
    return %arg0, %c0_i32 : i32, i32
  }
  func.func @transform_8(%arg0: i32) -> (i32, i32) {
    %c0_i32 = arith.constant 0 : i32
    %c0_i32_0 = arith.constant 0 : i32
    return %arg0, %c0_i32 : i32, i32
  }
  func.func @transform_9(%arg0: i32) -> (i32, i32) {
    %c0_i32 = arith.constant 0 : i32
    %c0_i32_0 = arith.constant 0 : i32
    return %arg0, %c0_i32 : i32, i32
  }
}

</mosaic_0001>

<llo_original>
// kernel: autoencoder_forward.1
$region0: #{autoencoder_forward.1}
  #allocation0 [shape = 'u32[]', space=smem, size = 0x4, offset = 0x4, fixed_abs, tag = 'smem constant byte address 0x4 - core index']
  #allocation1 [shape = 'u32[144,128]{1,0:T(1,128)}', space=vmem, size = 0x12000, scoped, tag = 'internal scratch']
  %s0 = inlined_call_operand.vmem [shape: f32[8,128], index: 0, kind: input, shape index: {}]
  %s1 = inlined_call_operand.vmem [shape: f32[8,128], index: 1, kind: input, shape index: {}]
  %s2 = inlined_call_operand.hbm [shape: f32[6,128,128], index: 2, kind: input, shape index: {}]
  %s3 = inlined_call_operand.hbm [shape: f32[6,128,128], index: 3, kind: input, shape index: {}]
  %s4 = inlined_call_operand.vmem [shape: f32[8,128], index: 4, kind: input, shape index: {}]
  %s5 = inlined_call_operand.vmem [shape: f32[8,128], index: 5, kind: input, shape index: {}]
  %s6 = inlined_call_operand.vmem [shape: f32[8,128], index: 6, kind: output, shape index: {0}]
  %s7 = inlined_call_operand.vmem [shape: f32[8,128], index: 7, kind: output, shape index: {1}]
  %s8 = inlined_call_operand.vmem [shape: f32[8,128], index: 8, kind: output, shape index: {2}]
  %s9 = inlined_call_operand.vmem [shape: f32[8,128], index: 9, kind: output, shape index: {3}]
  %10 = xla_tuple %s6, %s7, %s8, %s9
  %s11 = sld [smem:[#allocation0]]
  $region66: #{autoencoder_forward.1} parent=0
    _
  %s13 = ssub.s32 1, %s11
  %s14 = scalar_select 0, %s13, %s11
  $region1: #{autoencoder_forward.1} parent=0
    #allocation2 [shape = 'u8[393216]{0}', space=vmem, size = 0x60000, scoped, tag = 'input window, operand 2, single buffered']
    #allocation3 [shape = 's32[1]{0}', space=sflag, size = 0x4, scoped, tag = 'scoped memory for autoencoder_forward.1']
    #allocation4 [shape = 'u8[393216]{0}', space=vmem, size = 0x60000, scoped, tag = 'input window, operand 3, single buffered']
    #allocation5 [shape = 's32[1]{0}', space=sflag, size = 0x4, scoped, tag = 'scoped memory for autoencoder_forward.1']
    %15 = vsyncpa [#allocation3], 0
    %16 = vsyncpa [#allocation5], 0
    // Predicated region
    $region2: #{autoencoder_forward.1} parent=1 // pred_check
      _
    $region3: #{autoencoder_forward.1} parent=1 // pred_check_branch
      %18 = sbr.rel (0) target = $region5
    $region4: #{autoencoder_forward.1} parent=1 // pred_region
      _
    $region5: #{autoencoder_forward.1} parent=1 // pred_fallthru
      _
    // Predicated region
    $region6: #{autoencoder_forward.1} parent=1 // pred_check
      _
    $region7: #{autoencoder_forward.1} parent=1 // pred_check_branch
      %20 = sbr.rel (0) target = $region9
    $region8: #{autoencoder_forward.1} parent=1 // pred_region
      _
    $region9: #{autoencoder_forward.1} parent=1 // pred_fallthru
      _
    // Predicated region
    $region10: #{autoencoder_forward.1} parent=1 // pred_check
      _
    $region11: #{autoencoder_forward.1} parent=1 // pred_check_branch
      %22 = sbr.rel (0) target = $region13
    $region12: #{autoencoder_forward.1} parent=1 // pred_region
      %s24 = ssub.s32 12288, 12288
      %25 = vsyncadd [#allocation3], %s24
      %s26 = sshll.u32 [#allocation2], 4
      %s27 = int_to_ptr.vmem [resolvable:$true] %s26
      %32 = dma.hbm_to_vmem [thread:$0]  %s2, 12288, %s27, [#allocation3], 128, 128, 8
    $region13: #{autoencoder_forward.1} parent=1 // pred_fallthru
      _
    // Predicated region
    $region14: #{autoencoder_forward.1} parent=1 // pred_check
      _
    $region15: #{autoencoder_forward.1} parent=1 // pred_check_branch
      %34 = sbr.rel (0) target = $region17
    $region16: #{autoencoder_forward.1} parent=1 // pred_region
      %s36 = ssub.s32 12288, 12288
      %37 = vsyncadd [#allocation5], %s36
      %s38 = sshll.u32 [#allocation4], 4
      %s39 = int_to_ptr.vmem [resolvable:$true] %s38
      %44 = dma.hbm_to_vmem [thread:$0]  %s3, 12288, %s39, [#allocation5], 128, 128, 8
    $region17: #{autoencoder_forward.1} parent=1 // pred_fallthru
      _
    // Predicated region
    $region18: #{autoencoder_forward.1} parent=1 // pred_check
      _
    $region19: #{autoencoder_forward.1} parent=1 // pred_check_branch
      %46 = sbr.rel (0) target = $region21
    $region20: #{autoencoder_forward.1} parent=1 // pred_region
      _
    $region21: #{autoencoder_forward.1} parent=1 // pred_fallthru
      _
    // Predicated region
    $region22: #{autoencoder_forward.1} parent=1 // pred_check
      _
    $region23: #{autoencoder_forward.1} parent=1 // pred_check_branch
      %48 = sbr.rel (0) target = $region25
    $region24: #{autoencoder_forward.1} parent=1 // pred_region
      _
    $region25: #{autoencoder_forward.1} parent=1 // pred_fallthru
      _
    // Predicated region
    $region26: #{autoencoder_forward.1} parent=1 // pred_check
      _
    $region27: #{autoencoder_forward.1} parent=1 // pred_check_branch
      %50 = sbr.rel (0) target = $region29
    $region28: #{autoencoder_forward.1} parent=1 // pred_region
      %51 = dma.done [#allocation3], 12288
    $region29: #{autoencoder_forward.1} parent=1 // pred_fallthru
      _
    // Predicated region
    $region30: #{autoencoder_forward.1} parent=1 // pred_check
      _
    $region31: #{autoencoder_forward.1} parent=1 // pred_check_branch
      %53 = sbr.rel (0) target = $region33
    $region32: #{autoencoder_forward.1} parent=1 // pred_region
      %54 = dma.done [#allocation5], 12288
    $region33: #{autoencoder_forward.1} parent=1 // pred_fallthru
      _
    %v55 = vld [vmem:[%s0] sm:$0xff]
    %v56 = vld [vmem:[%s1] sm:$0xff]
    %v57 = vld [vmem:[%s4] sm:$0xff]
    %v58 = vld [vmem:[%s5] sm:$0xff]
    %v59 = vld [vmem:[#allocation2] sm:$0xff]
    %v60 = vld [vmem:[#allocation2 + $0x8] sm:$0xff]
    %v61 = vld [vmem:[#allocation2 + $0x10] sm:$0xff]
    %v62 = vld [vmem:[#allocation2 + $0x18] sm:$0xff]
    %v63 = vld [vmem:[#allocation2 + $0x20] sm:$0xff]
    %v64 = vld [vmem:[#allocation2 + $0x28] sm:$0xff]
    %v65 = vld [vmem:[#allocation2 + $0x30] sm:$0xff]
    %v66 = vld [vmem:[#allocation2 + $0x38] sm:$0xff]
    %v67 = vld [vmem:[#allocation2 + $0x40] sm:$0xff]
    %v68 = vld [vmem:[#allocation2 + $0x48] sm:$0xff]
    %v69 = vld [vmem:[#allocation2 + $0x50] sm:$0xff]
    %v70 = vld [vmem:[#allocation2 + $0x58] sm:$0xff]
    %v71 = vld [vmem:[#allocation2 + $0x60] sm:$0xff]
    %v72 = vld [vmem:[#allocation2 + $0x68] sm:$0xff]
    %v73 = vld [vmem:[#allocation2 + $0x70] sm:$0xff]
    %v74 = vld [vmem:[#allocation2 + $0x78] sm:$0xff]
    %v75 = vlaneseq
    %v76 = vshrl.u32 %v75, 7
    %v77 = vsub.s32 0, %v76
    %v78 = vrot.slane %v57, %v77
    %79 = vmatprep.subr.mxu0 0.0
    %80 = vmatpush1.msra.mxu0 %v74
    %81 = vmatprep.subr.mxu0 0.0
    %82 = vmatpush1.msra.mxu0 %v73
    %83 = vmatprep.subr.mxu0 0.0
    %84 = vmatpush1.msra.mxu0 %v72
    %85 = vmatprep.subr.mxu0 0.0
    %86 = vmatpush1.msra.mxu0 %v71
    %87 = vmatprep.subr.mxu0 0.0
    %88 = vmatpush1.msra.mxu0 %v70
    %89 = vmatprep.subr.mxu0 0.0
    %90 = vmatpush1.msra.mxu0 %v69
    %91 = vmatprep.subr.mxu0 0.0
    %92 = vmatpush1.msra.mxu0 %v68
    %93 = vmatprep.subr.mxu0 0.0
    %94 = vmatpush1.msra.mxu0 %v67
    %95 = vmatprep.subr.mxu0 0.0
    %96 = vmatpush1.msra.mxu0 %v66
    %97 = vmatprep.subr.mxu0 0.0
    %98 = vmatpush1.msra.mxu0 %v65
    %99 = vmatprep.subr.mxu0 0.0
    %100 = vmatpush1.msra.mxu0 %v64
    %101 = vmatprep.subr.mxu0 0.0
    %102 = vmatpush1.msra.mxu0 %v63
    %103 = vmatprep.subr.mxu0 0.0
    %104 = vmatpush1.msra.mxu0 %v62
    %105 = vmatprep.subr.mxu0 0.0
    %106 = vmatpush1.msra.mxu0 %v61
    %107 = vmatprep.subr.mxu0 0.0
    %108 = vmatpush1.msra.mxu0 %v60
    %109 = vmatprep.subr.mxu0 0.0
    %110 = vmatpush1.msra.mxu0 %v59
    %111 = vmatprep.subr.mxu0 0.0
    %112 = vmatpush2.msra.mxu0 0.0
    %113 = vmatprep.subr.mxu0 0.0
    %114 = vmatpush2.msra.mxu0 0.0
    %115 = vmatprep.subr.mxu0 0.0
    %116 = vmatpush2.msra.mxu0 0.0
    %117 = vmatprep.subr.mxu0 0.0
    %118 = vmatpush2.msra.mxu0 0.0
    %119 = vmatprep.subr.mxu0 0.0
    %120 = vmatpush2.msra.mxu0 0.0
    %121 = vmatprep.subr.mxu0 0.0
    %122 = vmatpush2.msra.mxu0 0.0
    %123 = vmatprep.subr.mxu0 0.0
    %124 = vmatpush2.msra.mxu0 0.0
    %125 = vmatprep.subr.mxu0 0.0
    %126 = vmatpush2.msra.mxu0 0.0
    %127 = vmatprep.subr.mxu0 0.0
    %128 = vmatpush2.msra.mxu0 0.0
    %129 = vmatprep.subr.mxu0 0.0
    %130 = vmatpush2.msra.mxu0 0.0
    %131 = vmatprep.subr.mxu0 0.0
    %132 = vmatpush2.msra.mxu0 0.0
    %133 = vmatprep.subr.mxu0 0.0
    %134 = vmatpush2.msra.mxu0 0.0
    %135 = vmatprep.subr.mxu0 0.0
    %136 = vmatpush2.msra.mxu0 0.0
    %137 = vmatprep.subr.mxu0 0.0
    %138 = vmatpush2.msra.mxu0 0.0
    %139 = vmatprep.subr.mxu0 0.0
    %140 = vmatpush2.msra.mxu0 0.0
    %141 = vmatprep.subr.mxu0 0.0
    %142 = vmatpush2.msra.mxu0 0.0
    %143 = vmatprep.mubr.f32.mxu0 0.0
    %144 = vmatmul.mubr.f32.gmra.mxu0 %v55
    %v145 = vpop.f32.mrf.mxu0
    %v146 = vadd.f32 %v78, %v145
    %v147 = vpop.f32.mrf.mxu0
    %148 = vdwg.mxu0
    %v149 = vld [vmem:[#allocation4] sm:$0xff]
    %v150 = vld [vmem:[#allocation4 + $0x8] sm:$0xff]
    %v151 = vld [vmem:[#allocation4 + $0x10] sm:$0xff]
    %v152 = vld [vmem:[#allocation4 + $0x18] sm:$0xff]
    %v153 = vld [vmem:[#allocation4 + $0x20] sm:$0xff]
    %v154 = vld [vmem:[#allocation4 + $0x28] sm:$0xff]
    %v155 = vld [vmem:[#allocation4 + $0x30] sm:$0xff]
    %v156 = vld [vmem:[#allocation4 + $0x38] sm:$0xff]
    %v157 = vld [vmem:[#allocation4 + $0x40] sm:$0xff]
    %v158 = vld [vmem:[#allocation4 + $0x48] sm:$0xff]
    %v159 = vld [vmem:[#allocation4 + $0x50] sm:$0xff]
    %v160 = vld [vmem:[#allocation4 + $0x58] sm:$0xff]
    %v161 = vld [vmem:[#allocation4 + $0x60] sm:$0xff]
    %v162 = vld [vmem:[#allocation4 + $0x68] sm:$0xff]
    %v163 = vld [vmem:[#allocation4 + $0x70] sm:$0xff]
    %v164 = vld [vmem:[#allocation4 + $0x78] sm:$0xff]
    %v165 = vlaneseq
    %v166 = vshrl.u32 %v165, 7
    %v167 = vsub.s32 0, %v166
    %v168 = vrot.slane %v58, %v167
    %169 = vmatprep.subr.mxu0 0.0
    %170 = vmatpush1.msra.mxu0 %v164
    %171 = vmatprep.subr.mxu0 0.0
    %172 = vmatpush1.msra.mxu0 %v163
    %173 = vmatprep.subr.mxu0 0.0
    %174 = vmatpush1.msra.mxu0 %v162
    %175 = vmatprep.subr.mxu0 0.0
    %176 = vmatpush1.msra.mxu0 %v161
    %177 = vmatprep.subr.mxu0 0.0
    %178 = vmatpush1.msra.mxu0 %v160
    %179 = vmatprep.subr.mxu0 0.0
    %180 = vmatpush1.msra.mxu0 %v159
    %181 = vmatprep.subr.mxu0 0.0
    %182 = vmatpush1.msra.mxu0 %v158
    %183 = vmatprep.subr.mxu0 0.0
    %184 = vmatpush1.msra.mxu0 %v157
    %185 = vmatprep.subr.mxu0 0.0
    %186 = vmatpush1.msra.mxu0 %v156
    %187 = vmatprep.subr.mxu0 0.0
    %188 = vmatpush1.msra.mxu0 %v155
    %189 = vmatprep.subr.mxu0 0.0
    %190 = vmatpush1.msra.mxu0 %v154
    %191 = vmatprep.subr.mxu0 0.0
    %192 = vmatpush1.msra.mxu0 %v153
    %193 = vmatprep.subr.mxu0 0.0
    %194 = vmatpush1.msra.mxu0 %v152
    %195 = vmatprep.subr.mxu0 0.0
    %196 = vmatpush1.msra.mxu0 %v151
    %197 = vmatprep.subr.mxu0 0.0
    %198 = vmatpush1.msra.mxu0 %v150
    %199 = vmatprep.subr.mxu0 0.0
    %200 = vmatpush1.msra.mxu0 %v149
    %201 = vmatprep.subr.mxu0 0.0
    %202 = vmatpush2.msra.mxu0 0.0
    %203 = vmatprep.subr.mxu0 0.0
    %204 = vmatpush2.msra.mxu0 0.0
    %205 = vmatprep.subr.mxu0 0.0
    %206 = vmatpush2.msra.mxu0 0.0
    %207 = vmatprep.subr.mxu0 0.0
    %208 = vmatpush2.msra.mxu0 0.0
    %209 = vmatprep.subr.mxu0 0.0
    %210 = vmatpush2.msra.mxu0 0.0
    %211 = vmatprep.subr.mxu0 0.0
    %212 = vmatpush2.msra.mxu0 0.0
    %213 = vmatprep.subr.mxu0 0.0
    %214 = vmatpush2.msra.mxu0 0.0
    %215 = vmatprep.subr.mxu0 0.0
    %216 = vmatpush2.msra.mxu0 0.0
    %217 = vmatprep.subr.mxu0 0.0
    %218 = vmatpush2.msra.mxu0 0.0
    %219 = vmatprep.subr.mxu0 0.0
    %220 = vmatpush2.msra.mxu0 0.0
    %221 = vmatprep.subr.mxu0 0.0
    %222 = vmatpush2.msra.mxu0 0.0
    %223 = vmatprep.subr.mxu0 0.0
    %224 = vmatpush2.msra.mxu0 0.0
    %225 = vmatprep.subr.mxu0 0.0
    %226 = vmatpush2.msra.mxu0 0.0
    %227 = vmatprep.subr.mxu0 0.0
    %228 = vmatpush2.msra.mxu0 0.0
    %229 = vmatprep.subr.mxu0 0.0
    %230 = vmatpush2.msra.mxu0 0.0
    %231 = vmatprep.subr.mxu0 0.0
    %232 = vmatpush2.msra.mxu0 0.0
    %233 = vmatprep.mubr.f32.mxu0 0.0
    %234 = vmatmul.mubr.f32.gmra.mxu0 %v56
    %v235 = vpop.f32.mrf.mxu0
    %v236 = vadd.f32 %v168, %v235
    %v237 = vpop.f32.mrf.mxu0
    %238 = vdwg.mxu0
    %v239 = vmul.f32 %v146, 0.5
    %v240 = vtanh.pop %v239
    %v241 = vmul.f32 %v240, 0.5
    %v242 = vadd.f32 %v241, 0.5
    %v243 = vmul.f32 %v236, 0.5
    %v244 = vtanh.pop %v243
    %v245 = vmul.f32 %v244, 0.5
    %v246 = vadd.f32 %v245, 0.5
    %s247 = scalar_lea.vmem [#allocation2], 128
    %v248 = vld [vmem:[%s247] sm:$0xff]
    %v249 = vld [vmem:[%s247 + $0x8] sm:$0xff]
    %v250 = vld [vmem:[%s247 + $0x10] sm:$0xff]
    %v251 = vld [vmem:[%s247 + $0x18] sm:$0xff]
    %v252 = vld [vmem:[%s247 + $0x20] sm:$0xff]
    %v253 = vld [vmem:[%s247 + $0x28] sm:$0xff]
    %v254 = vld [vmem:[%s247 + $0x30] sm:$0xff]
    %v255 = vld [vmem:[%s247 + $0x38] sm:$0xff]
    %v256 = vld [vmem:[%s247 + $0x40] sm:$0xff]
    %v257 = vld [vmem:[%s247 + $0x48] sm:$0xff]
    %v258 = vld [vmem:[%s247 + $0x50] sm:$0xff]
    %v259 = vld [vmem:[%s247 + $0x58] sm:$0xff]
    %v260 = vld [vmem:[%s247 + $0x60] sm:$0xff]
    %v261 = vld [vmem:[%s247 + $0x68] sm:$0xff]
    %v262 = vld [vmem:[%s247 + $0x70] sm:$0xff]
    %v263 = vld [vmem:[%s247 + $0x78] sm:$0xff]
    %v264 = vlaneseq
    %v265 = vshrl.u32 %v264, 7
    %v266 = vsub.s32 1, %v265
    %v267 = vrot.slane %v57, %v266
    %268 = vmatprep.subr.mxu0 0.0
    %269 = vmatpush1.msra.mxu0 %v263
    %270 = vmatprep.subr.mxu0 0.0
    %271 = vmatpush1.msra.mxu0 %v262
    %272 = vmatprep.subr.mxu0 0.0
    %273 = vmatpush1.msra.mxu0 %v261
    %274 = vmatprep.subr.mxu0 0.0
    %275 = vmatpush1.msra.mxu0 %v260
    %276 = vmatprep.subr.mxu0 0.0
    %277 = vmatpush1.msra.mxu0 %v259
    %278 = vmatprep.subr.mxu0 0.0
    %279 = vmatpush1.msra.mxu0 %v258
    %280 = vmatprep.subr.mxu0 0.0
    %281 = vmatpush1.msra.mxu0 %v257
    %282 = vmatprep.subr.mxu0 0.0
    %283 = vmatpush1.msra.mxu0 %v256
    %284 = vmatprep.subr.mxu0 0.0
    %285 = vmatpush1.msra.mxu0 %v255
    %286 = vmatprep.subr.mxu0 0.0
    %287 = vmatpush1.msra.mxu0 %v254
    %288 = vmatprep.subr.mxu0 0.0
    %289 = vmatpush1.msra.mxu0 %v253
    %290 = vmatprep.subr.mxu0 0.0
    %291 = vmatpush1.msra.mxu0 %v252
    %292 = vmatprep.subr.mxu0 0.0
    %293 = vmatpush1.msra.mxu0 %v251
    %294 = vmatprep.subr.mxu0 0.0
    %295 = vmatpush1.msra.mxu0 %v250
    %296 = vmatprep.subr.mxu0 0.0
    %297 = vmatpush1.msra.mxu0 %v249
    %298 = vmatprep.subr.mxu0 0.0
    %299 = vmatpush1.msra.mxu0 %v248
    %300 = vmatprep.subr.mxu0 0.0
    %301 = vmatpush2.msra.mxu0 0.0
    %302 = vmatprep.subr.mxu0 0.0
    %303 = vmatpush2.msra.mxu0 0.0
    %304 = vmatprep.subr.mxu0 0.0
    %305 = vmatpush2.msra.mxu0 0.0
    %306 = vmatprep.subr.mxu0 0.0
    %307 = vmatpush2.msra.mxu0 0.0
    %308 = vmatprep.subr.mxu0 0.0
    %309 = vmatpush2.msra.mxu0 0.0
    %310 = vmatprep.subr.mxu0 0.0
    %311 = vmatpush2.msra.mxu0 0.0
    %312 = vmatprep.subr.mxu0 0.0
    %313 = vmatpush2.msra.mxu0 0.0
    %314 = vmatprep.subr.mxu0 0.0
    %315 = vmatpush2.msra.mxu0 0.0
    %316 = vmatprep.subr.mxu0 0.0
    %317 = vmatpush2.msra.mxu0 0.0
    %318 = vmatprep.subr.mxu0 0.0
    %319 = vmatpush2.msra.mxu0 0.0
    %320 = vmatprep.subr.mxu0 0.0
    %321 = vmatpush2.msra.mxu0 0.0
    %322 = vmatprep.subr.mxu0 0.0
    %323 = vmatpush2.msra.mxu0 0.0
    %324 = vmatprep.subr.mxu0 0.0
    %325 = vmatpush2.msra.mxu0 0.0
    %326 = vmatprep.subr.mxu0 0.0
    %327 = vmatpush2.msra.mxu0 0.0
    %328 = vmatprep.subr.mxu0 0.0
    %329 = vmatpush2.msra.mxu0 0.0
    %330 = vmatprep.subr.mxu0 0.0
    %331 = vmatpush2.msra.mxu0 0.0
    %332 = vmatprep.mubr.f32.mxu0 0.0
    %333 = vmatmul.mubr.f32.gmra.mxu0 %v242
    %v334 = vpop.f32.mrf.mxu0
    %v335 = vadd.f32 %v267, %v334
    %v336 = vpop.f32.mrf.mxu0
    %337 = vdwg.mxu0
    %s338 = scalar_lea.vmem [#allocation4], 128
    %v339 = vld [vmem:[%s338] sm:$0xff]
    %v340 = vld [vmem:[%s338 + $0x8] sm:$0xff]
    %v341 = vld [vmem:[%s338 + $0x10] sm:$0xff]
    %v342 = vld [vmem:[%s338 + $0x18] sm:$0xff]
    %v343 = vld [vmem:[%s338 + $0x20] sm:$0xff]
    %v344 = vld [vmem:[%s338 + $0x28] sm:$0xff]
    %v345 = vld [vmem:[%s338 + $0x30] sm:$0xff]
    %v346 = vld [vmem:[%s338 + $0x38] sm:$0xff]
    %v347 = vld [vmem:[%s338 + $0x40] sm:$0xff]
    %v348 = vld [vmem:[%s338 + $0x48] sm:$0xff]
    %v349 = vld [vmem:[%s338 + $0x50] sm:$0xff]
    %v350 = vld [vmem:[%s338 + $0x58] sm:$0xff]
    %v351 = vld [vmem:[%s338 + $0x60] sm:$0xff]
    %v352 = vld [vmem:[%s338 + $0x68] sm:$0xff]
    %v353 = vld [vmem:[%s338 + $0x70] sm:$0xff]
    %v354 = vld [vmem:[%s338 + $0x78] sm:$0xff]
    %v355 = vlaneseq
    %v356 = vshrl.u32 %v355, 7
    %v357 = vsub.s32 1, %v356
    %v358 = vrot.slane %v58, %v357
    %359 = vmatprep.subr.mxu0 0.0
    %360 = vmatpush1.msra.mxu0 %v354
    %361 = vmatprep.subr.mxu0 0.0
    %362 = vmatpush1.msra.mxu0 %v353
    %363 = vmatprep.subr.mxu0 0.0
    %364 = vmatpush1.msra.mxu0 %v352
    %365 = vmatprep.subr.mxu0 0.0
    %366 = vmatpush1.msra.mxu0 %v351
    %367 = vmatprep.subr.mxu0 0.0
    %368 = vmatpush1.msra.mxu0 %v350
    %369 = vmatprep.subr.mxu0 0.0
    %370 = vmatpush1.msra.mxu0 %v349
    %371 = vmatprep.subr.mxu0 0.0
    %372 = vmatpush1.msra.mxu0 %v348
    %373 = vmatprep.subr.mxu0 0.0
    %374 = vmatpush1.msra.mxu0 %v347
    %375 = vmatprep.subr.mxu0 0.0
    %376 = vmatpush1.msra.mxu0 %v346
    %377 = vmatprep.subr.mxu0 0.0
    %378 = vmatpush1.msra.mxu0 %v345
    %379 = vmatprep.subr.mxu0 0.0
    %380 = vmatpush1.msra.mxu0 %v344
    %381 = vmatprep.subr.mxu0 0.0
    %382 = vmatpush1.msra.mxu0 %v343
    %383 = vmatprep.subr.mxu0 0.0
    %384 = vmatpush1.msra.mxu0 %v342
    %385 = vmatprep.subr.mxu0 0.0
    %386 = vmatpush1.msra.mxu0 %v341
    %387 = vmatprep.subr.mxu0 0.0
    %388 = vmatpush1.msra.mxu0 %v340
    %389 = vmatprep.subr.mxu0 0.0
    %390 = vmatpush1.msra.mxu0 %v339
    %391 = vmatprep.subr.mxu0 0.0
    %392 = vmatpush2.msra.mxu0 0.0
    %393 = vmatprep.subr.mxu0 0.0
    %394 = vmatpush2.msra.mxu0 0.0
    %395 = vmatprep.subr.mxu0 0.0
    %396 = vmatpush2.msra.mxu0 0.0
    %397 = vmatprep.subr.mxu0 0.0
    %398 = vmatpush2.msra.mxu0 0.0
    %399 = vmatprep.subr.mxu0 0.0
    %400 = vmatpush2.msra.mxu0 0.0
    %401 = vmatprep.subr.mxu0 0.0
    %402 = vmatpush2.msra.mxu0 0.0
    %403 = vmatprep.subr.mxu0 0.0
    %404 = vmatpush2.msra.mxu0 0.0
    %405 = vmatprep.subr.mxu0 0.0
    %406 = vmatpush2.msra.mxu0 0.0
    %407 = vmatprep.subr.mxu0 0.0
    %408 = vmatpush2.msra.mxu0 0.0
    %409 = vmatprep.subr.mxu0 0.0
    %410 = vmatpush2.msra.mxu0 0.0
    %411 = vmatprep.subr.mxu0 0.0
    %412 = vmatpush2.msra.mxu0 0.0
    %413 = vmatprep.subr.mxu0 0.0
    %414 = vmatpush2.msra.mxu0 0.0
    %415 = vmatprep.subr.mxu0 0.0
    %416 = vmatpush2.msra.mxu0 0.0
    %417 = vmatprep.subr.mxu0 0.0
    %418 = vmatpush2.msra.mxu0 0.0
    %419 = vmatprep.subr.mxu0 0.0
    %420 = vmatpush2.msra.mxu0 0.0
    %421 = vmatprep.subr.mxu0 0.0
    %422 = vmatpush2.msra.mxu0 0.0
    %423 = vmatprep.mubr.f32.mxu0 0.0
    %424 = vmatmul.mubr.f32.gmra.mxu0 %v246
    %v425 = vpop.f32.mrf.mxu0
    %v426 = vadd.f32 %v358, %v425
    %v427 = vpop.f32.mrf.mxu0
    %428 = vdwg.mxu0
    %v429 = vmul.f32 %v335, 0.5
    %v430 = vtanh.pop %v429
    %v431 = vmul.f32 %v430, 0.5
    %v432 = vadd.f32 %v431, 0.5
    %v433 = vmul.f32 %v426, 0.5
    %v434 = vtanh.pop %v433
    %v435 = vmul.f32 %v434, 0.5
    %v436 = vadd.f32 %v435, 0.5
    %s437 = scalar_lea.vmem [#allocation2], 256
    %v438 = vld [vmem:[%s437] sm:$0xff]
    %v439 = vld [vmem:[%s437 + $0x8] sm:$0xff]
    %v440 = vld [vmem:[%s437 + $0x10] sm:$0xff]
    %v441 = vld [vmem:[%s437 + $0x18] sm:$0xff]
    %v442 = vld [vmem:[%s437 + $0x20] sm:$0xff]
    %v443 = vld [vmem:[%s437 + $0x28] sm:$0xff]
    %v444 = vld [vmem:[%s437 + $0x30] sm:$0xff]
    %v445 = vld [vmem:[%s437 + $0x38] sm:$0xff]
    %v446 = vld [vmem:[%s437 + $0x40] sm:$0xff]
    %v447 = vld [vmem:[%s437 + $0x48] sm:$0xff]
    %v448 = vld [vmem:[%s437 + $0x50] sm:$0xff]
    %v449 = vld [vmem:[%s437 + $0x58] sm:$0xff]
    %v450 = vld [vmem:[%s437 + $0x60] sm:$0xff]
    %v451 = vld [vmem:[%s437 + $0x68] sm:$0xff]
    %v452 = vld [vmem:[%s437 + $0x70] sm:$0xff]
    %v453 = vld [vmem:[%s437 + $0x78] sm:$0xff]
    %v454 = vlaneseq
    %v455 = vshrl.u32 %v454, 7
    %v456 = vsub.s32 2, %v455
    %v457 = vrot.slane %v57, %v456
    %458 = vmatprep.subr.mxu0 0.0
    %459 = vmatpush1.msra.mxu0 %v453
    %460 = vmatprep.subr.mxu0 0.0
    %461 = vmatpush1.msra.mxu0 %v452
    %462 = vmatprep.subr.mxu0 0.0
    %463 = vmatpush1.msra.mxu0 %v451
    %464 = vmatprep.subr.mxu0 0.0
    %465 = vmatpush1.msra.mxu0 %v450
    %466 = vmatprep.subr.mxu0 0.0
    %467 = vmatpush1.msra.mxu0 %v449
    %468 = vmatprep.subr.mxu0 0.0
    %469 = vmatpush1.msra.mxu0 %v448
    %470 = vmatprep.subr.mxu0 0.0
    %471 = vmatpush1.msra.mxu0 %v447
    %472 = vmatprep.subr.mxu0 0.0
    %473 = vmatpush1.msra.mxu0 %v446
    %474 = vmatprep.subr.mxu0 0.0
    %475 = vmatpush1.msra.mxu0 %v445
    %476 = vmatprep.subr.mxu0 0.0
    %477 = vmatpush1.msra.mxu0 %v444
    %478 = vmatprep.subr.mxu0 0.0
    %479 = vmatpush1.msra.mxu0 %v443
    %480 = vmatprep.subr.mxu0 0.0
    %481 = vmatpush1.msra.mxu0 %v442
    %482 = vmatprep.subr.mxu0 0.0
    %483 = vmatpush1.msra.mxu0 %v441
    %484 = vmatprep.subr.mxu0 0.0
    %485 = vmatpush1.msra.mxu0 %v440
    %486 = vmatprep.subr.mxu0 0.0
    %487 = vmatpush1.msra.mxu0 %v439
    %488 = vmatprep.subr.mxu0 0.0
    %489 = vmatpush1.msra.mxu0 %v438
    %490 = vmatprep.subr.mxu0 0.0
    %491 = vmatpush2.msra.mxu0 0.0
    %492 = vmatprep.subr.mxu0 0.0
    %493 = vmatpush2.msra.mxu0 0.0
    %494 = vmatprep.subr.mxu0 0.0
    %495 = vmatpush2.msra.mxu0 0.0
    %496 = vmatprep.subr.mxu0 0.0
    %497 = vmatpush2.msra.mxu0 0.0
    %498 = vmatprep.subr.mxu0 0.0
    %499 = vmatpush2.msra.mxu0 0.0
    %500 = vmatprep.subr.mxu0 0.0
    %501 = vmatpush2.msra.mxu0 0.0
    %502 = vmatprep.subr.mxu0 0.0
    %503 = vmatpush2.msra.mxu0 0.0
    %504 = vmatprep.subr.mxu0 0.0
    %505 = vmatpush2.msra.mxu0 0.0
    %506 = vmatprep.subr.mxu0 0.0
    %507 = vmatpush2.msra.mxu0 0.0
    %508 = vmatprep.subr.mxu0 0.0
    %509 = vmatpush2.msra.mxu0 0.0
    %510 = vmatprep.subr.mxu0 0.0
    %511 = vmatpush2.msra.mxu0 0.0
    %512 = vmatprep.subr.mxu0 0.0
    %513 = vmatpush2.msra.mxu0 0.0
    %514 = vmatprep.subr.mxu0 0.0
    %515 = vmatpush2.msra.mxu0 0.0
    %516 = vmatprep.subr.mxu0 0.0
    %517 = vmatpush2.msra.mxu0 0.0
    %518 = vmatprep.subr.mxu0 0.0
    %519 = vmatpush2.msra.mxu0 0.0
    %520 = vmatprep.subr.mxu0 0.0
    %521 = vmatpush2.msra.mxu0 0.0
    %522 = vmatprep.mubr.f32.mxu0 0.0
    %523 = vmatmul.mubr.f32.gmra.mxu0 %v432
    %v524 = vpop.f32.mrf.mxu0
    %v525 = vadd.f32 %v457, %v524
    %v526 = vpop.f32.mrf.mxu0
    %527 = vdwg.mxu0
    %s528 = scalar_lea.vmem [#allocation4], 256
    %v529 = vld [vmem:[%s528] sm:$0xff]
    %v530 = vld [vmem:[%s528 + $0x8] sm:$0xff]
    %v531 = vld [vmem:[%s528 + $0x10] sm:$0xff]
    %v532 = vld [vmem:[%s528 + $0x18] sm:$0xff]
    %v533 = vld [vmem:[%s528 + $0x20] sm:$0xff]
    %v534 = vld [vmem:[%s528 + $0x28] sm:$0xff]
    %v535 = vld [vmem:[%s528 + $0x30] sm:$0xff]
    %v536 = vld [vmem:[%s528 + $0x38] sm:$0xff]
    %v537 = vld [vmem:[%s528 + $0x40] sm:$0xff]
    %v538 = vld [vmem:[%s528 + $0x48] sm:$0xff]
    %v539 = vld [vmem:[%s528 + $0x50] sm:$0xff]
    %v540 = vld [vmem:[%s528 + $0x58] sm:$0xff]
    %v541 = vld [vmem:[%s528 + $0x60] sm:$0xff]
    %v542 = vld [vmem:[%s528 + $0x68] sm:$0xff]
    %v543 = vld [vmem:[%s528 + $0x70] sm:$0xff]
    %v544 = vld [vmem:[%s528 + $0x78] sm:$0xff]
    %v545 = vlaneseq
    %v546 = vshrl.u32 %v545, 7
    %v547 = vsub.s32 2, %v546
    %v548 = vrot.slane %v58, %v547
    %549 = vmatprep.subr.mxu0 0.0
    %550 = vmatpush1.msra.mxu0 %v544
    %551 = vmatprep.subr.mxu0 0.0
    %552 = vmatpush1.msra.mxu0 %v543
    %553 = vmatprep.subr.mxu0 0.0
    %554 = vmatpush1.msra.mxu0 %v542
    %555 = vmatprep.subr.mxu0 0.0
    %556 = vmatpush1.msra.mxu0 %v541
    %557 = vmatprep.subr.mxu0 0.0
    %558 = vmatpush1.msra.mxu0 %v540
    %559 = vmatprep.subr.mxu0 0.0
    %560 = vmatpush1.msra.mxu0 %v539
    %561 = vmatprep.subr.mxu0 0.0
    %562 = vmatpush1.msra.mxu0 %v538
    %563 = vmatprep.subr.mxu0 0.0
    %564 = vmatpush1.msra.mxu0 %v537
    %565 = vmatprep.subr.mxu0 0.0
    %566 = vmatpush1.msra.mxu0 %v536
    %567 = vmatprep.subr.mxu0 0.0
    %568 = vmatpush1.msra.mxu0 %v535
    %569 = vmatprep.subr.mxu0 0.0
    %570 = vmatpush1.msra.mxu0 %v534
    %571 = vmatprep.subr.mxu0 0.0
    %572 = vmatpush1.msra.mxu0 %v533
    %573 = vmatprep.subr.mxu0 0.0
    %574 = vmatpush1.msra.mxu0 %v532
    %575 = vmatprep.subr.mxu0 0.0
    %576 = vmatpush1.msra.mxu0 %v531
    %577 = vmatprep.subr.mxu0 0.0
    %578 = vmatpush1.msra.mxu0 %v530
    %579 = vmatprep.subr.mxu0 0.0
    %580 = vmatpush1.msra.mxu0 %v529
    %581 = vmatprep.subr.mxu0 0.0
    %582 = vmatpush2.msra.mxu0 0.0
    %583 = vmatprep.subr.mxu0 0.0
    %584 = vmatpush2.msra.mxu0 0.0
    %585 = vmatprep.subr.mxu0 0.0
    %586 = vmatpush2.msra.mxu0 0.0
    %587 = vmatprep.subr.mxu0 0.0
    %588 = vmatpush2.msra.mxu0 0.0
    %589 = vmatprep.subr.mxu0 0.0
    %590 = vmatpush2.msra.mxu0 0.0
    %591 = vmatprep.subr.mxu0 0.0
    %592 = vmatpush2.msra.mxu0 0.0
    %593 = vmatprep.subr.mxu0 0.0
    %594 = vmatpush2.msra.mxu0 0.0
    %595 = vmatprep.subr.mxu0 0.0
    %596 = vmatpush2.msra.mxu0 0.0
    %597 = vmatprep.subr.mxu0 0.0
    %598 = vmatpush2.msra.mxu0 0.0
    %599 = vmatprep.subr.mxu0 0.0
    %600 = vmatpush2.msra.mxu0 0.0
    %601 = vmatprep.subr.mxu0 0.0
    %602 = vmatpush2.msra.mxu0 0.0
    %603 = vmatprep.subr.mxu0 0.0
    %604 = vmatpush2.msra.mxu0 0.0
    %605 = vmatprep.subr.mxu0 0.0
    %606 = vmatpush2.msra.mxu0 0.0
    %607 = vmatprep.subr.mxu0 0.0
    %608 = vmatpush2.msra.mxu0 0.0
    %609 = vmatprep.subr.mxu0 0.0
    %610 = vmatpush2.msra.mxu0 0.0
    %611 = vmatprep.subr.mxu0 0.0
    %612 = vmatpush2.msra.mxu0 0.0
    %613 = vmatprep.mubr.f32.mxu0 0.0
    %614 = vmatmul.mubr.f32.gmra.mxu0 %v436
    %v615 = vpop.f32.mrf.mxu0
    %v616 = vadd.f32 %v548, %v615
    %v617 = vpop.f32.mrf.mxu0
    %618 = vdwg.mxu0
    %v619 = vmul.f32 %v525, 0.5
    %v620 = vtanh.pop %v619
    %v621 = vmul.f32 %v620, 0.5
    %v622 = vadd.f32 %v621, 0.5
    %v623 = vmul.f32 %v616, 0.5
    %v624 = vtanh.pop %v623
    %v625 = vmul.f32 %v624, 0.5
    %v626 = vadd.f32 %v625, 0.5
    %627 = vst [vmem:[%s6] sm:$0xff] %v622
    %628 = vst [vmem:[%s8] sm:$0xff] %v626
    %s629 = scalar_lea.vmem [#allocation2], 384
    %v630 = vld [vmem:[%s629] sm:$0xff]
    %v631 = vld [vmem:[%s629 + $0x8] sm:$0xff]
    %v632 = vld [vmem:[%s629 + $0x10] sm:$0xff]
    %v633 = vld [vmem:[%s629 + $0x18] sm:$0xff]
    %v634 = vld [vmem:[%s629 + $0x20] sm:$0xff]
    %v635 = vld [vmem:[%s629 + $0x28] sm:$0xff]
    %v636 = vld [vmem:[%s629 + $0x30] sm:$0xff]
    %v637 = vld [vmem:[%s629 + $0x38] sm:$0xff]
    %v638 = vld [vmem:[%s629 + $0x40] sm:$0xff]
    %v639 = vld [vmem:[%s629 + $0x48] sm:$0xff]
    %v640 = vld [vmem:[%s629 + $0x50] sm:$0xff]
    %v641 = vld [vmem:[%s629 + $0x58] sm:$0xff]
    %v642 = vld [vmem:[%s629 + $0x60] sm:$0xff]
    %v643 = vld [vmem:[%s629 + $0x68] sm:$0xff]
    %v644 = vld [vmem:[%s629 + $0x70] sm:$0xff]
    %v645 = vld [vmem:[%s629 + $0x78] sm:$0xff]
    %v646 = vlaneseq
    %v647 = vshrl.u32 %v646, 7
    %v648 = vsub.s32 3, %v647
    %v649 = vrot.slane %v57, %v648
    %650 = vmatprep.subr.mxu0 0.0
    %651 = vmatpush1.msra.mxu0 %v645
    %652 = vmatprep.subr.mxu0 0.0
    %653 = vmatpush1.msra.mxu0 %v644
    %654 = vmatprep.subr.mxu0 0.0
    %655 = vmatpush1.msra.mxu0 %v643
    %656 = vmatprep.subr.mxu0 0.0
    %657 = vmatpush1.msra.mxu0 %v642
    %658 = vmatprep.subr.mxu0 0.0
    %659 = vmatpush1.msra.mxu0 %v641
    %660 = vmatprep.subr.mxu0 0.0
    %661 = vmatpush1.msra.mxu0 %v640
    %662 = vmatprep.subr.mxu0 0.0
    %663 = vmatpush1.msra.mxu0 %v639
    %664 = vmatprep.subr.mxu0 0.0
    %665 = vmatpush1.msra.mxu0 %v638
    %666 = vmatprep.subr.mxu0 0.0
    %667 = vmatpush1.msra.mxu0 %v637
    %668 = vmatprep.subr.mxu0 0.0
    %669 = vmatpush1.msra.mxu0 %v636
    %670 = vmatprep.subr.mxu0 0.0
    %671 = vmatpush1.msra.mxu0 %v635
    %672 = vmatprep.subr.mxu0 0.0
    %673 = vmatpush1.msra.mxu0 %v634
    %674 = vmatprep.subr.mxu0 0.0
    %675 = vmatpush1.msra.mxu0 %v633
    %676 = vmatprep.subr.mxu0 0.0
    %677 = vmatpush1.msra.mxu0 %v632
    %678 = vmatprep.subr.mxu0 0.0
    %679 = vmatpush1.msra.mxu0 %v631
    %680 = vmatprep.subr.mxu0 0.0
    %681 = vmatpush1.msra.mxu0 %v630
    %682 = vmatprep.subr.mxu0 0.0
    %683 = vmatpush2.msra.mxu0 0.0
    %684 = vmatprep.subr.mxu0 0.0
    %685 = vmatpush2.msra.mxu0 0.0
    %686 = vmatprep.subr.mxu0 0.0
    %687 = vmatpush2.msra.mxu0 0.0
    %688 = vmatprep.subr.mxu0 0.0
    %689 = vmatpush2.msra.mxu0 0.0
    %690 = vmatprep.subr.mxu0 0.0
    %691 = vmatpush2.msra.mxu0 0.0
    %692 = vmatprep.subr.mxu0 0.0
    %693 = vmatpush2.msra.mxu0 0.0
    %694 = vmatprep.subr.mxu0 0.0
    %695 = vmatpush2.msra.mxu0 0.0
    %696 = vmatprep.subr.mxu0 0.0
    %697 = vmatpush2.msra.mxu0 0.0
    %698 = vmatprep.subr.mxu0 0.0
    %699 = vmatpush2.msra.mxu0 0.0
    %700 = vmatprep.subr.mxu0 0.0
    %701 = vmatpush2.msra.mxu0 0.0
    %702 = vmatprep.subr.mxu0 0.0
    %703 = vmatpush2.msra.mxu0 0.0
    %704 = vmatprep.subr.mxu0 0.0
    %705 = vmatpush2.msra.mxu0 0.0
    %706 = vmatprep.subr.mxu0 0.0
    %707 = vmatpush2.msra.mxu0 0.0
    %708 = vmatprep.subr.mxu0 0.0
    %709 = vmatpush2.msra.mxu0 0.0
    %710 = vmatprep.subr.mxu0 0.0
    %711 = vmatpush2.msra.mxu0 0.0
    %712 = vmatprep.subr.mxu0 0.0
    %713 = vmatpush2.msra.mxu0 0.0
    %714 = vmatprep.mubr.f32.mxu0 0.0
    %715 = vmatmul.mubr.f32.gmra.mxu0 %v622
    %v716 = vpop.f32.mrf.mxu0
    %v717 = vadd.f32 %v649, %v716
    %v718 = vpop.f32.mrf.mxu0
    %719 = vdwg.mxu0
    %s720 = scalar_lea.vmem [#allocation4], 384
    %v721 = vld [vmem:[%s720] sm:$0xff]
    %v722 = vld [vmem:[%s720 + $0x8] sm:$0xff]
    %v723 = vld [vmem:[%s720 + $0x10] sm:$0xff]
    %v724 = vld [vmem:[%s720 + $0x18] sm:$0xff]
    %v725 = vld [vmem:[%s720 + $0x20] sm:$0xff]
    %v726 = vld [vmem:[%s720 + $0x28] sm:$0xff]
    %v727 = vld [vmem:[%s720 + $0x30] sm:$0xff]
    %v728 = vld [vmem:[%s720 + $0x38] sm:$0xff]
    %v729 = vld [vmem:[%s720 + $0x40] sm:$0xff]
    %v730 = vld [vmem:[%s720 + $0x48] sm:$0xff]
    %v731 = vld [vmem:[%s720 + $0x50] sm:$0xff]
    %v732 = vld [vmem:[%s720 + $0x58] sm:$0xff]
    %v733 = vld [vmem:[%s720 + $0x60] sm:$0xff]
    %v734 = vld [vmem:[%s720 + $0x68] sm:$0xff]
    %v735 = vld [vmem:[%s720 + $0x70] sm:$0xff]
    %v736 = vld [vmem:[%s720 + $0x78] sm:$0xff]
    %v737 = vlaneseq
    %v738 = vshrl.u32 %v737, 7
    %v739 = vsub.s32 3, %v738
    %v740 = vrot.slane %v58, %v739
    %741 = vmatprep.subr.mxu0 0.0
    %742 = vmatpush1.msra.mxu0 %v736
    %743 = vmatprep.subr.mxu0 0.0
    %744 = vmatpush1.msra.mxu0 %v735
    %745 = vmatprep.subr.mxu0 0.0
    %746 = vmatpush1.msra.mxu0 %v734
    %747 = vmatprep.subr.mxu0 0.0
    %748 = vmatpush1.msra.mxu0 %v733
    %749 = vmatprep.subr.mxu0 0.0
    %750 = vmatpush1.msra.mxu0 %v732
    %751 = vmatprep.subr.mxu0 0.0
    %752 = vmatpush1.msra.mxu0 %v731
    %753 = vmatprep.subr.mxu0 0.0
    %754 = vmatpush1.msra.mxu0 %v730
    %755 = vmatprep.subr.mxu0 0.0
    %756 = vmatpush1.msra.mxu0 %v729
    %757 = vmatprep.subr.mxu0 0.0
    %758 = vmatpush1.msra.mxu0 %v728
    %759 = vmatprep.subr.mxu0 0.0
    %760 = vmatpush1.msra.mxu0 %v727
    %761 = vmatprep.subr.mxu0 0.0
    %762 = vmatpush1.msra.mxu0 %v726
    %763 = vmatprep.subr.mxu0 0.0
    %764 = vmatpush1.msra.mxu0 %v725
    %765 = vmatprep.subr.mxu0 0.0
    %766 = vmatpush1.msra.mxu0 %v724
    %767 = vmatprep.subr.mxu0 0.0
    %768 = vmatpush1.msra.mxu0 %v723
    %769 = vmatprep.subr.mxu0 0.0
    %770 = vmatpush1.msra.mxu0 %v722
    %771 = vmatprep.subr.mxu0 0.0
    %772 = vmatpush1.msra.mxu0 %v721
    %773 = vmatprep.subr.mxu0 0.0
    %774 = vmatpush2.msra.mxu0 0.0
    %775 = vmatprep.subr.mxu0 0.0
    %776 = vmatpush2.msra.mxu0 0.0
    %777 = vmatprep.subr.mxu0 0.0
    %778 = vmatpush2.msra.mxu0 0.0
    %779 = vmatprep.subr.mxu0 0.0
    %780 = vmatpush2.msra.mxu0 0.0
    %781 = vmatprep.subr.mxu0 0.0
    %782 = vmatpush2.msra.mxu0 0.0
    %783 = vmatprep.subr.mxu0 0.0
    %784 = vmatpush2.msra.mxu0 0.0
    %785 = vmatprep.subr.mxu0 0.0
    %786 = vmatpush2.msra.mxu0 0.0
    %787 = vmatprep.subr.mxu0 0.0
    %788 = vmatpush2.msra.mxu0 0.0
    %789 = vmatprep.subr.mxu0 0.0
    %790 = vmatpush2.msra.mxu0 0.0
    %791 = vmatprep.subr.mxu0 0.0
    %792 = vmatpush2.msra.mxu0 0.0
    %793 = vmatprep.subr.mxu0 0.0
    %794 = vmatpush2.msra.mxu0 0.0
    %795 = vmatprep.subr.mxu0 0.0
    %796 = vmatpush2.msra.mxu0 0.0
    %797 = vmatprep.subr.mxu0 0.0
    %798 = vmatpush2.msra.mxu0 0.0
    %799 = vmatprep.subr.mxu0 0.0
    %800 = vmatpush2.msra.mxu0 0.0
    %801 = vmatprep.subr.mxu0 0.0
    %802 = vmatpush2.msra.mxu0 0.0
    %803 = vmatprep.subr.mxu0 0.0
    %804 = vmatpush2.msra.mxu0 0.0
    %805 = vmatprep.mubr.f32.mxu0 0.0
    %806 = vmatmul.mubr.f32.gmra.mxu0 %v626
    %v807 = vpop.f32.mrf.mxu0
    %v808 = vadd.f32 %v740, %v807
    %v809 = vpop.f32.mrf.mxu0
    %810 = vdwg.mxu0
    %v811 = vmul.f32 %v717, 0.5
    %v812 = vtanh.pop %v811
    %v813 = vmul.f32 %v812, 0.5
    %v814 = vadd.f32 %v813, 0.5
    %v815 = vmul.f32 %v808, 0.5
    %v816 = vtanh.pop %v815
    %v817 = vmul.f32 %v816, 0.5
    %v818 = vadd.f32 %v817, 0.5
    %s819 = scalar_lea.vmem [#allocation2], 512
    %v820 = vld [vmem:[%s819] sm:$0xff]
    %v821 = vld [vmem:[%s819 + $0x8] sm:$0xff]
    %v822 = vld [vmem:[%s819 + $0x10] sm:$0xff]
    %v823 = vld [vmem:[%s819 + $0x18] sm:$0xff]
    %v824 = vld [vmem:[%s819 + $0x20] sm:$0xff]
    %v825 = vld [vmem:[%s819 + $0x28] sm:$0xff]
    %v826 = vld [vmem:[%s819 + $0x30] sm:$0xff]
    %v827 = vld [vmem:[%s819 + $0x38] sm:$0xff]
    %v828 = vld [vmem:[%s819 + $0x40] sm:$0xff]
    %v829 = vld [vmem:[%s819 + $0x48] sm:$0xff]
    %v830 = vld [vmem:[%s819 + $0x50] sm:$0xff]
    %v831 = vld [vmem:[%s819 + $0x58] sm:$0xff]
    %v832 = vld [vmem:[%s819 + $0x60] sm:$0xff]
    %v833 = vld [vmem:[%s819 + $0x68] sm:$0xff]
    %v834 = vld [vmem:[%s819 + $0x70] sm:$0xff]
    %v835 = vld [vmem:[%s819 + $0x78] sm:$0xff]
    %v836 = vlaneseq
    %v837 = vshrl.u32 %v836, 7
    %v838 = vsub.s32 4, %v837
    %v839 = vrot.slane %v57, %v838
    %840 = vmatprep.subr.mxu0 0.0
    %841 = vmatpush1.msra.mxu0 %v835
    %842 = vmatprep.subr.mxu0 0.0
    %843 = vmatpush1.msra.mxu0 %v834
    %844 = vmatprep.subr.mxu0 0.0
    %845 = vmatpush1.msra.mxu0 %v833
    %846 = vmatprep.subr.mxu0 0.0
    %847 = vmatpush1.msra.mxu0 %v832
    %848 = vmatprep.subr.mxu0 0.0
    %849 = vmatpush1.msra.mxu0 %v831
    %850 = vmatprep.subr.mxu0 0.0
    %851 = vmatpush1.msra.mxu0 %v830
    %852 = vmatprep.subr.mxu0 0.0
    %853 = vmatpush1.msra.mxu0 %v829
    %854 = vmatprep.subr.mxu0 0.0
    %855 = vmatpush1.msra.mxu0 %v828
    %856 = vmatprep.subr.mxu0 0.0
    %857 = vmatpush1.msra.mxu0 %v827
    %858 = vmatprep.subr.mxu0 0.0
    %859 = vmatpush1.msra.mxu0 %v826
    %860 = vmatprep.subr.mxu0 0.0
    %861 = vmatpush1.msra.mxu0 %v825
    %862 = vmatprep.subr.mxu0 0.0
    %863 = vmatpush1.msra.mxu0 %v824
    %864 = vmatprep.subr.mxu0 0.0
    %865 = vmatpush1.msra.mxu0 %v823
    %866 = vmatprep.subr.mxu0 0.0
    %867 = vmatpush1.msra.mxu0 %v822
    %868 = vmatprep.subr.mxu0 0.0
    %869 = vmatpush1.msra.mxu0 %v821
    %870 = vmatprep.subr.mxu0 0.0
    %871 = vmatpush1.msra.mxu0 %v820
    %872 = vmatprep.subr.mxu0 0.0
    %873 = vmatpush2.msra.mxu0 0.0
    %874 = vmatprep.subr.mxu0 0.0
    %875 = vmatpush2.msra.mxu0 0.0
    %876 = vmatprep.subr.mxu0 0.0
    %877 = vmatpush2.msra.mxu0 0.0
    %878 = vmatprep.subr.mxu0 0.0
    %879 = vmatpush2.msra.mxu0 0.0
    %880 = vmatprep.subr.mxu0 0.0
    %881 = vmatpush2.msra.mxu0 0.0
    %882 = vmatprep.subr.mxu0 0.0
    %883 = vmatpush2.msra.mxu0 0.0
    %884 = vmatprep.subr.mxu0 0.0
    %885 = vmatpush2.msra.mxu0 0.0
    %886 = vmatprep.subr.mxu0 0.0
    %887 = vmatpush2.msra.mxu0 0.0
    %888 = vmatprep.subr.mxu0 0.0
    %889 = vmatpush2.msra.mxu0 0.0
    %890 = vmatprep.subr.mxu0 0.0
    %891 = vmatpush2.msra.mxu0 0.0
    %892 = vmatprep.subr.mxu0 0.0
    %893 = vmatpush2.msra.mxu0 0.0
    %894 = vmatprep.subr.mxu0 0.0
    %895 = vmatpush2.msra.mxu0 0.0
    %896 = vmatprep.subr.mxu0 0.0
    %897 = vmatpush2.msra.mxu0 0.0
    %898 = vmatprep.subr.mxu0 0.0
    %899 = vmatpush2.msra.mxu0 0.0
    %900 = vmatprep.subr.mxu0 0.0
    %901 = vmatpush2.msra.mxu0 0.0
    %902 = vmatprep.subr.mxu0 0.0
    %903 = vmatpush2.msra.mxu0 0.0
    %904 = vmatprep.mubr.f32.mxu0 0.0
    %905 = vmatmul.mubr.f32.gmra.mxu0 %v814
    %v906 = vpop.f32.mrf.mxu0
    %v907 = vadd.f32 %v839, %v906
    %v908 = vpop.f32.mrf.mxu0
    %909 = vdwg.mxu0
    %s910 = scalar_lea.vmem [#allocation4], 512
    %v911 = vld [vmem:[%s910] sm:$0xff]
    %v912 = vld [vmem:[%s910 + $0x8] sm:$0xff]
    %v913 = vld [vmem:[%s910 + $0x10] sm:$0xff]
    %v914 = vld [vmem:[%s910 + $0x18] sm:$0xff]
    %v915 = vld [vmem:[%s910 + $0x20] sm:$0xff]
    %v916 = vld [vmem:[%s910 + $0x28] sm:$0xff]
    %v917 = vld [vmem:[%s910 + $0x30] sm:$0xff]
    %v918 = vld [vmem:[%s910 + $0x38] sm:$0xff]
    %v919 = vld [vmem:[%s910 + $0x40] sm:$0xff]
    %v920 = vld [vmem:[%s910 + $0x48] sm:$0xff]
    %v921 = vld [vmem:[%s910 + $0x50] sm:$0xff]
    %v922 = vld [vmem:[%s910 + $0x58] sm:$0xff]
    %v923 = vld [vmem:[%s910 + $0x60] sm:$0xff]
    %v924 = vld [vmem:[%s910 + $0x68] sm:$0xff]
    %v925 = vld [vmem:[%s910 + $0x70] sm:$0xff]
    %v926 = vld [vmem:[%s910 + $0x78] sm:$0xff]
    %v927 = vlaneseq
    %v928 = vshrl.u32 %v927, 7
    %v929 = vsub.s32 4, %v928
    %v930 = vrot.slane %v58, %v929
    %931 = vmatprep.subr.mxu0 0.0
    %932 = vmatpush1.msra.mxu0 %v926
    %933 = vmatprep.subr.mxu0 0.0
    %934 = vmatpush1.msra.mxu0 %v925
    %935 = vmatprep.subr.mxu0 0.0
    %936 = vmatpush1.msra.mxu0 %v924
    %937 = vmatprep.subr.mxu0 0.0
    %938 = vmatpush1.msra.mxu0 %v923
    %939 = vmatprep.subr.mxu0 0.0
    %940 = vmatpush1.msra.mxu0 %v922
    %941 = vmatprep.subr.mxu0 0.0
    %942 = vmatpush1.msra.mxu0 %v921
    %943 = vmatprep.subr.mxu0 0.0
    %944 = vmatpush1.msra.mxu0 %v920
    %945 = vmatprep.subr.mxu0 0.0
    %946 = vmatpush1.msra.mxu0 %v919
    %947 = vmatprep.subr.mxu0 0.0
    %948 = vmatpush1.msra.mxu0 %v918
    %949 = vmatprep.subr.mxu0 0.0
    %950 = vmatpush1.msra.mxu0 %v917
    %951 = vmatprep.subr.mxu0 0.0
    %952 = vmatpush1.msra.mxu0 %v916
    %953 = vmatprep.subr.mxu0 0.0
    %954 = vmatpush1.msra.mxu0 %v915
    %955 = vmatprep.subr.mxu0 0.0
    %956 = vmatpush1.msra.mxu0 %v914
    %957 = vmatprep.subr.mxu0 0.0
    %958 = vmatpush1.msra.mxu0 %v913
    %959 = vmatprep.subr.mxu0 0.0
    %960 = vmatpush1.msra.mxu0 %v912
    %961 = vmatprep.subr.mxu0 0.0
    %962 = vmatpush1.msra.mxu0 %v911
    %963 = vmatprep.subr.mxu0 0.0
    %964 = vmatpush2.msra.mxu0 0.0
    %965 = vmatprep.subr.mxu0 0.0
    %966 = vmatpush2.msra.mxu0 0.0
    %967 = vmatprep.subr.mxu0 0.0
    %968 = vmatpush2.msra.mxu0 0.0
    %969 = vmatprep.subr.mxu0 0.0
    %970 = vmatpush2.msra.mxu0 0.0
    %971 = vmatprep.subr.mxu0 0.0
    %972 = vmatpush2.msra.mxu0 0.0
    %973 = vmatprep.subr.mxu0 0.0
    %974 = vmatpush2.msra.mxu0 0.0
    %975 = vmatprep.subr.mxu0 0.0
    %976 = vmatpush2.msra.mxu0 0.0
    %977 = vmatprep.subr.mxu0 0.0
    %978 = vmatpush2.msra.mxu0 0.0
    %979 = vmatprep.subr.mxu0 0.0
    %980 = vmatpush2.msra.mxu0 0.0
    %981 = vmatprep.subr.mxu0 0.0
    %982 = vmatpush2.msra.mxu0 0.0
    %983 = vmatprep.subr.mxu0 0.0
    %984 = vmatpush2.msra.mxu0 0.0
    %985 = vmatprep.subr.mxu0 0.0
    %986 = vmatpush2.msra.mxu0 0.0
    %987 = vmatprep.subr.mxu0 0.0
    %988 = vmatpush2.msra.mxu0 0.0
    %989 = vmatprep.subr.mxu0 0.0
    %990 = vmatpush2.msra.mxu0 0.0
    %991 = vmatprep.subr.mxu0 0.0
    %992 = vmatpush2.msra.mxu0 0.0
    %993 = vmatprep.subr.mxu0 0.0
    %994 = vmatpush2.msra.mxu0 0.0
    %995 = vmatprep.mubr.f32.mxu0 0.0
    %996 = vmatmul.mubr.f32.gmra.mxu0 %v818
    %v997 = vpop.f32.mrf.mxu0
    %v998 = vadd.f32 %v930, %v997
    %v999 = vpop.f32.mrf.mxu0
    %1000 = vdwg.mxu0
    %v1001 = vmul.f32 %v907, 0.5
    %v1002 = vtanh.pop %v1001
    %v1003 = vmul.f32 %v1002, 0.5
    %v1004 = vadd.f32 %v1003, 0.5
    %v1005 = vmul.f32 %v998, 0.5
    %v1006 = vtanh.pop %v1005
    %v1007 = vmul.f32 %v1006, 0.5
    %v1008 = vadd.f32 %v1007, 0.5
    %s1009 = scalar_lea.vmem [#allocation2], 640
    %v1010 = vld [vmem:[%s1009] sm:$0xff]
    %v1011 = vld [vmem:[%s1009 + $0x8] sm:$0xff]
    %v1012 = vld [vmem:[%s1009 + $0x10] sm:$0xff]
    %v1013 = vld [vmem:[%s1009 + $0x18] sm:$0xff]
    %v1014 = vld [vmem:[%s1009 + $0x20] sm:$0xff]
    %v1015 = vld [vmem:[%s1009 + $0x28] sm:$0xff]
    %v1016 = vld [vmem:[%s1009 + $0x30] sm:$0xff]
    %v1017 = vld [vmem:[%s1009 + $0x38] sm:$0xff]
    %v1018 = vld [vmem:[%s1009 + $0x40] sm:$0xff]
    %v1019 = vld [vmem:[%s1009 + $0x48] sm:$0xff]
    %v1020 = vld [vmem:[%s1009 + $0x50] sm:$0xff]
    %v1021 = vld [vmem:[%s1009 + $0x58] sm:$0xff]
    %v1022 = vld [vmem:[%s1009 + $0x60] sm:$0xff]
    %v1023 = vld [vmem:[%s1009 + $0x68] sm:$0xff]
    %v1024 = vld [vmem:[%s1009 + $0x70] sm:$0xff]
    %v1025 = vld [vmem:[%s1009 + $0x78] sm:$0xff]
    %v1026 = vlaneseq
    %v1027 = vshrl.u32 %v1026, 7
    %v1028 = vsub.s32 5, %v1027
    %v1029 = vrot.slane %v57, %v1028
    %1030 = vmatprep.subr.mxu0 0.0
    %1031 = vmatpush1.msra.mxu0 %v1025
    %1032 = vmatprep.subr.mxu0 0.0
    %1033 = vmatpush1.msra.mxu0 %v1024
    %1034 = vmatprep.subr.mxu0 0.0
    %1035 = vmatpush1.msra.mxu0 %v1023
    %1036 = vmatprep.subr.mxu0 0.0
    %1037 = vmatpush1.msra.mxu0 %v1022
    %1038 = vmatprep.subr.mxu0 0.0
    %1039 = vmatpush1.msra.mxu0 %v1021
    %1040 = vmatprep.subr.mxu0 0.0
    %1041 = vmatpush1.msra.mxu0 %v1020
    %1042 = vmatprep.subr.mxu0 0.0
    %1043 = vmatpush1.msra.mxu0 %v1019
    %1044 = vmatprep.subr.mxu0 0.0
    %1045 = vmatpush1.msra.mxu0 %v1018
    %1046 = vmatprep.subr.mxu0 0.0
    %1047 = vmatpush1.msra.mxu0 %v1017
    %1048 = vmatprep.subr.mxu0 0.0
    %1049 = vmatpush1.msra.mxu0 %v1016
    %1050 = vmatprep.subr.mxu0 0.0
    %1051 = vmatpush1.msra.mxu0 %v1015
    %1052 = vmatprep.subr.mxu0 0.0
    %1053 = vmatpush1.msra.mxu0 %v1014
    %1054 = vmatprep.subr.mxu0 0.0
    %1055 = vmatpush1.msra.mxu0 %v1013
    %1056 = vmatprep.subr.mxu0 0.0
    %1057 = vmatpush1.msra.mxu0 %v1012
    %1058 = vmatprep.subr.mxu0 0.0
    %1059 = vmatpush1.msra.mxu0 %v1011
    %1060 = vmatprep.subr.mxu0 0.0
    %1061 = vmatpush1.msra.mxu0 %v1010
    %1062 = vmatprep.subr.mxu0 0.0
    %1063 = vmatpush2.msra.mxu0 0.0
    %1064 = vmatprep.subr.mxu0 0.0
    %1065 = vmatpush2.msra.mxu0 0.0
    %1066 = vmatprep.subr.mxu0 0.0
    %1067 = vmatpush2.msra.mxu0 0.0
    %1068 = vmatprep.subr.mxu0 0.0
    %1069 = vmatpush2.msra.mxu0 0.0
    %1070 = vmatprep.subr.mxu0 0.0
    %1071 = vmatpush2.msra.mxu0 0.0
    %1072 = vmatprep.subr.mxu0 0.0
    %1073 = vmatpush2.msra.mxu0 0.0
    %1074 = vmatprep.subr.mxu0 0.0
    %1075 = vmatpush2.msra.mxu0 0.0
    %1076 = vmatprep.subr.mxu0 0.0
    %1077 = vmatpush2.msra.mxu0 0.0
    %1078 = vmatprep.subr.mxu0 0.0
    %1079 = vmatpush2.msra.mxu0 0.0
    %1080 = vmatprep.subr.mxu0 0.0
    %1081 = vmatpush2.msra.mxu0 0.0
    %1082 = vmatprep.subr.mxu0 0.0
    %1083 = vmatpush2.msra.mxu0 0.0
    %1084 = vmatprep.subr.mxu0 0.0
    %1085 = vmatpush2.msra.mxu0 0.0
    %1086 = vmatprep.subr.mxu0 0.0
    %1087 = vmatpush2.msra.mxu0 0.0
    %1088 = vmatprep.subr.mxu0 0.0
    %1089 = vmatpush2.msra.mxu0 0.0
    %1090 = vmatprep.subr.mxu0 0.0
    %1091 = vmatpush2.msra.mxu0 0.0
    %1092 = vmatprep.subr.mxu0 0.0
    %1093 = vmatpush2.msra.mxu0 0.0
    %1094 = vmatprep.mubr.f32.mxu0 0.0
    %1095 = vmatmul.mubr.f32.gmra.mxu0 %v1004
    %v1096 = vpop.f32.mrf.mxu0
    %v1097 = vadd.f32 %v1029, %v1096
    %v1098 = vpop.f32.mrf.mxu0
    %1099 = vdwg.mxu0
    %s1100 = scalar_lea.vmem [#allocation4], 640
    %v1101 = vld [vmem:[%s1100] sm:$0xff]
    %v1102 = vld [vmem:[%s1100 + $0x8] sm:$0xff]
    %v1103 = vld [vmem:[%s1100 + $0x10] sm:$0xff]
    %v1104 = vld [vmem:[%s1100 + $0x18] sm:$0xff]
    %v1105 = vld [vmem:[%s1100 + $0x20] sm:$0xff]
    %v1106 = vld [vmem:[%s1100 + $0x28] sm:$0xff]
    %v1107 = vld [vmem:[%s1100 + $0x30] sm:$0xff]
    %v1108 = vld [vmem:[%s1100 + $0x38] sm:$0xff]
    %v1109 = vld [vmem:[%s1100 + $0x40] sm:$0xff]
    %v1110 = vld [vmem:[%s1100 + $0x48] sm:$0xff]
    %v1111 = vld [vmem:[%s1100 + $0x50] sm:$0xff]
    %v1112 = vld [vmem:[%s1100 + $0x58] sm:$0xff]
    %v1113 = vld [vmem:[%s1100 + $0x60] sm:$0xff]
    %v1114 = vld [vmem:[%s1100 + $0x68] sm:$0xff]
    %v1115 = vld [vmem:[%s1100 + $0x70] sm:$0xff]
    %v1116 = vld [vmem:[%s1100 + $0x78] sm:$0xff]
    %v1117 = vlaneseq
    %v1118 = vshrl.u32 %v1117, 7
    %v1119 = vsub.s32 5, %v1118
    %v1120 = vrot.slane %v58, %v1119
    %1121 = vmatprep.subr.mxu0 0.0
    %1122 = vmatpush1.msra.mxu0 %v1116
    %1123 = vmatprep.subr.mxu0 0.0
    %1124 = vmatpush1.msra.mxu0 %v1115
    %1125 = vmatprep.subr.mxu0 0.0
    %1126 = vmatpush1.msra.mxu0 %v1114
    %1127 = vmatprep.subr.mxu0 0.0
    %1128 = vmatpush1.msra.mxu0 %v1113
    %1129 = vmatprep.subr.mxu0 0.0
    %1130 = vmatpush1.msra.mxu0 %v1112
    %1131 = vmatprep.subr.mxu0 0.0
    %1132 = vmatpush1.msra.mxu0 %v1111
    %1133 = vmatprep.subr.mxu0 0.0
    %1134 = vmatpush1.msra.mxu0 %v1110
    %1135 = vmatprep.subr.mxu0 0.0
    %1136 = vmatpush1.msra.mxu0 %v1109
    %1137 = vmatprep.subr.mxu0 0.0
    %1138 = vmatpush1.msra.mxu0 %v1108
    %1139 = vmatprep.subr.mxu0 0.0
    %1140 = vmatpush1.msra.mxu0 %v1107
    %1141 = vmatprep.subr.mxu0 0.0
    %1142 = vmatpush1.msra.mxu0 %v1106
    %1143 = vmatprep.subr.mxu0 0.0
    %1144 = vmatpush1.msra.mxu0 %v1105
    %1145 = vmatprep.subr.mxu0 0.0
    %1146 = vmatpush1.msra.mxu0 %v1104
    %1147 = vmatprep.subr.mxu0 0.0
    %1148 = vmatpush1.msra.mxu0 %v1103
    %1149 = vmatprep.subr.mxu0 0.0
    %1150 = vmatpush1.msra.mxu0 %v1102
    %1151 = vmatprep.subr.mxu0 0.0
    %1152 = vmatpush1.msra.mxu0 %v1101
    %1153 = vmatprep.subr.mxu0 0.0
    %1154 = vmatpush2.msra.mxu0 0.0
    %1155 = vmatprep.subr.mxu0 0.0
    %1156 = vmatpush2.msra.mxu0 0.0
    %1157 = vmatprep.subr.mxu0 0.0
    %1158 = vmatpush2.msra.mxu0 0.0
    %1159 = vmatprep.subr.mxu0 0.0
    %1160 = vmatpush2.msra.mxu0 0.0
    %1161 = vmatprep.subr.mxu0 0.0
    %1162 = vmatpush2.msra.mxu0 0.0
    %1163 = vmatprep.subr.mxu0 0.0
    %1164 = vmatpush2.msra.mxu0 0.0
    %1165 = vmatprep.subr.mxu0 0.0
    %1166 = vmatpush2.msra.mxu0 0.0
    %1167 = vmatprep.subr.mxu0 0.0
    %1168 = vmatpush2.msra.mxu0 0.0
    %1169 = vmatprep.subr.mxu0 0.0
    %1170 = vmatpush2.msra.mxu0 0.0
    %1171 = vmatprep.subr.mxu0 0.0
    %1172 = vmatpush2.msra.mxu0 0.0
    %1173 = vmatprep.subr.mxu0 0.0
    %1174 = vmatpush2.msra.mxu0 0.0
    %1175 = vmatprep.subr.mxu0 0.0
    %1176 = vmatpush2.msra.mxu0 0.0
    %1177 = vmatprep.subr.mxu0 0.0
    %1178 = vmatpush2.msra.mxu0 0.0
    %1179 = vmatprep.subr.mxu0 0.0
    %1180 = vmatpush2.msra.mxu0 0.0
    %1181 = vmatprep.subr.mxu0 0.0
    %1182 = vmatpush2.msra.mxu0 0.0
    %1183 = vmatprep.subr.mxu0 0.0
    %1184 = vmatpush2.msra.mxu0 0.0
    %1185 = vmatprep.mubr.f32.mxu0 0.0
    %1186 = vmatmul.mubr.f32.gmra.mxu0 %v1008
    %v1187 = vpop.f32.mrf.mxu0
    %v1188 = vadd.f32 %v1120, %v1187
    %v1189 = vpop.f32.mrf.mxu0
    %1190 = vdwg.mxu0
    %v1191 = vmul.f32 %v1097, 0.5
    %v1192 = vtanh.pop %v1191
    %v1193 = vmul.f32 %v1192, 0.5
    %v1194 = vadd.f32 %v1193, 0.5
    %v1195 = vmul.f32 %v1188, 0.5
    %v1196 = vtanh.pop %v1195
    %v1197 = vmul.f32 %v1196, 0.5
    %v1198 = vadd.f32 %v1197, 0.5
    %1199 = vst [vmem:[%s7] sm:$0xff] %v1194
    %1200 = vst [vmem:[%s9] sm:$0xff] %v1198
    // Predicated region
    $region34: #{autoencoder_forward.1} parent=1 // pred_check
      _
    $region35: #{autoencoder_forward.1} parent=1 // pred_check_branch
      %1202 = sbr.rel (0) target = $region37
    $region36: #{autoencoder_forward.1} parent=1 // pred_region
      _
    $region37: #{autoencoder_forward.1} parent=1 // pred_fallthru
      _
    // Predicated region
    $region38: #{autoencoder_forward.1} parent=1 // pred_check
      _
    $region39: #{autoencoder_forward.1} parent=1 // pred_check_branch
      %1204 = sbr.rel (0) target = $region41
    $region40: #{autoencoder_forward.1} parent=1 // pred_region
      _
    $region41: #{autoencoder_forward.1} parent=1 // pred_fallthru
      _
    // Predicated region
    $region42: #{autoencoder_forward.1} parent=1 // pred_check
      _
    $region43: #{autoencoder_forward.1} parent=1 // pred_check_branch
      %1206 = sbr.rel (0) target = $region45
    $region44: #{autoencoder_forward.1} parent=1 // pred_region
      _
    $region45: #{autoencoder_forward.1} parent=1 // pred_fallthru
      _
    // Predicated region
    $region46: #{autoencoder_forward.1} parent=1 // pred_check
      _
    $region47: #{autoencoder_forward.1} parent=1 // pred_check_branch
      %1208 = sbr.rel (0) target = $region49
    $region48: #{autoencoder_forward.1} parent=1 // pred_region
      _
    $region49: #{autoencoder_forward.1} parent=1 // pred_fallthru
      _
    // Predicated region
    $region50: #{autoencoder_forward.1} parent=1 // pred_check
      _
    $region51: #{autoencoder_forward.1} parent=1 // pred_check_branch
      %1210 = sbr.rel (0) target = $region53
    $region52: #{autoencoder_forward.1} parent=1 // pred_region
      _
    $region53: #{autoencoder_forward.1} parent=1 // pred_fallthru
      _
    // Predicated region
    $region54: #{autoencoder_forward.1} parent=1 // pred_check
      _
    $region55: #{autoencoder_forward.1} parent=1 // pred_check_branch
      %1212 = sbr.rel (0) target = $region57
    $region56: #{autoencoder_forward.1} parent=1 // pred_region
      _
    $region57: #{autoencoder_forward.1} parent=1 // pred_fallthru
      _
    // Predicated region
    $region58: #{autoencoder_forward.1} parent=1 // pred_check
      _
    $region59: #{autoencoder_forward.1} parent=1 // pred_check_branch
      %1214 = sbr.rel (0) target = $region61
    $region60: #{autoencoder_forward.1} parent=1 // pred_region
      _
    $region61: #{autoencoder_forward.1} parent=1 // pred_fallthru
      _
    // Predicated region
    $region62: #{autoencoder_forward.1} parent=1 // pred_check
      _
    $region63: #{autoencoder_forward.1} parent=1 // pred_check_branch
      %1216 = sbr.rel (0) target = $region65
    $region64: #{autoencoder_forward.1} parent=1 // pred_region
      _
    $region65: #{autoencoder_forward.1} parent=1 // pred_fallthru
      _
    %1217 = vsyncpa [#allocation3], 1
    %1218 = vsyncpa [#allocation5], 1

</llo_original>
